<compile_context>
chip_gen: v5e
topology: v5e:2x2
jax: 0.10.0
libtpu: 0.0.40
codegen_flags: <defaults>
</compile_context>

<pallas_src>
import functools
import math

import jax
import jax.numpy as jnp
from jax.experimental import pallas as pl
from jax.experimental.pallas import tpu as pltpu

_VMEM_BUDGET = 32 * 1024 * 1024  # soft cap for double-buffered tile footprint
_VMEM_LIMIT = 48 * 1024 * 1024   # hard compiler limit; leaves headroom on v7x (64 MiB)


def _round_up(x, m):
    return ((x + m - 1) // m) * m


def _tm_candidates(Mp):
    cands = []
    if Mp <= 512:
        cands.append(Mp)
    cands += [c for c in (512, 256, 128, 64, 32, 16, 8) if c <= Mp and Mp % c == 0]
    seen, out = set(), []
    for c in cands:
        if c not in seen:
            seen.add(c)
            out.append(c)
    return out


def _mm_foot(tm, K, tn):
    # double-buffered x + w + out + bias tiles, f32 worst case
    return 2 * (tm * K + K * tn + tm * tn + tn) * 4


def _select_tiles(M, K, N, budget):
    """Pick (Mp, tm, Np, tn); prefer big M tiles, then full-N (no padding)."""
    Mp = _round_up(M, 8)
    Np128 = _round_up(N, 128)
    tns_split = [c for c in (2048, 1536, 1024, 768, 512, 384, 256, 128)
                 if c <= Np128 and Np128 % c == 0]
    for tm in _tm_candidates(Mp):
        if _mm_foot(tm, K, N) <= budget:
            return Mp, tm, N, N          # full-N tile, no column split, no padding
        for tn in tns_split:
            if _mm_foot(tm, K, tn) <= budget:
                return Mp, tm, Np128, tn
    return Mp, 8, Np128, 128


# --------------------------------------------------------------------------
# Kernel 1: matmul + bias + (optional) exact erf-GELU
# --------------------------------------------------------------------------
def _matmul_bias_act_kernel(x_ref, w_ref, b_ref, o_ref, *, activation):
    x = x_ref[...]
    w = w_ref[...]
    if x.dtype != w.dtype:          # bf16 weights: cast the activation tile in-VMEM
        x = x.astype(w.dtype)
    y = jax.lax.dot_general(x, w, (((1,), (0,)), ((), ())),
                            preferred_element_type=jnp.float32)
    y = y + b_ref[...].astype(jnp.float32)
    if activation == "gelu":
        # exact GELU: x * 0.5 * (1 + erf(x / sqrt(2)))  (matches torch.erf version)
        y = y * 0.5 * (1.0 + jax.lax.erf(y * (1.0 / math.sqrt(2.0))))
    o_ref[...] = y.astype(o_ref.dtype)


def matmul_bias_act(x, w, b, *, activation="none"):
    """y = act(x @ w + b).  x:[M,K], w:[K,N], b:[N] -> [M,N]."""
    M, K = x.shape
    Kw, N = w.shape
    assert K == Kw
    out_dtype = x.dtype

    Mp, tm, Np, tn = _select_tiles(M, K, N, _VMEM_BUDGET)
    if Mp != M:
        x = jnp.pad(x, ((0, Mp - M), (0, 0)))
    if Np != N:
        w = jnp.pad(w, ((0, 0), (0, Np - N)))
        b = jnp.pad(b, (0, Np - N))
    b2 = b.reshape(1, Np)
    Mi, Nj = Mp // tm, Np // tn

    # Grid-order selection: the operand whose block index changes on the inner
    # axis is re-streamed from HBM; put the smaller total re-stream there.
    if Nj == 1 or Mi * Np <= Nj * Mp:
        grid = (Mi, Nj)                      # j inner: W re-streamed Mi times
        x_spec = pl.BlockSpec((tm, K), lambda i, j: (i, 0))
        w_spec = pl.BlockSpec((K, tn), lambda i, j: (0, j))
        b_spec = pl.BlockSpec((1, tn), lambda i, j: (0, j))
        o_spec = pl.BlockSpec((tm, tn), lambda i, j: (i, j))
    else:
        grid = (Nj, Mi)                      # i inner: x re-streamed Nj times
        x_spec = pl.BlockSpec((tm, K), lambda j, i: (i, 0))
        w_spec = pl.BlockSpec((K, tn), lambda j, i: (0, j))
        b_spec = pl.BlockSpec((1, tn), lambda j, i: (0, j))
        o_spec = pl.BlockSpec((tm, tn), lambda j, i: (i, j))

    out = pl.pallas_call(
        functools.partial(_matmul_bias_act_kernel, activation=activation),
        out_shape=jax.ShapeDtypeStruct((Mp, Np), out_dtype),
        grid_spec=pltpu.PrefetchScalarGridSpec(
            num_scalar_prefetch=0,
            grid=grid,
            in_specs=[x_spec, w_spec, b_spec],
            out_specs=o_spec,
        ),
        compiler_params=pltpu.CompilerParams(
            dimension_semantics=("parallel", "parallel"),
            vmem_limit_bytes=_VMEM_LIMIT,
        ),
    )(x, w, b2)

    if Mp != M or Np != N:
        out = out[:M, :N]
    return out


# --------------------------------------------------------------------------
# Kernel 2: matmul + bias + residual add + LayerNorm (eps=1e-12) fused epilogue
# --------------------------------------------------------------------------
def _matmul_bias_residual_ln_kernel(x_ref, w_ref, b_ref, r_ref, g_ref, bb_ref,
                                    o_ref, *, eps):
    x = x_ref[...]
    w = w_ref[...]
    if x.dtype != w.dtype:
        x = x.astype(w.dtype)
    y = jax.lax.dot_general(x, w, (((1,), (0,)), ((), ())),
                            preferred_element_type=jnp.float32)
    y = y + b_ref[...].astype(jnp.float32) + r_ref[...].astype(jnp.float32)
    mu = jnp.mean(y, axis=-1, keepdims=True)
    d = y - mu
    var = jnp.mean(d * d, axis=-1, keepdims=True)
    out = d * jax.lax.rsqrt(var + eps)
    out = out * g_ref[...].astype(jnp.float32) + bb_ref[...].astype(jnp.float32)
    o_ref[...] = out.astype(o_ref.dtype)


def _pick_tm_ln(M, K, N, budget):
    Mp = _round_up(M, 8)
    cands = _tm_candidates(Mp)
    for tm in cands:
        foot = 2 * (tm * K + K * N + 2 * tm * N + 3 * N) * 4
        if foot <= budget:
            return Mp, tm
    return Mp, cands[-1]


def matmul_bias_residual_layernorm(x, w, b, residual, gamma, beta, *, eps=1e-12):
    """LayerNorm(x @ w + b + residual) * gamma + beta, one kernel (full-N tile)."""
    M, K = x.shape
    Kw, N = w.shape
    assert K == Kw and residual.shape == (M, N)
    out_dtype = residual.dtype

    Mp, tm = _pick_tm_ln(M, K, N, _VMEM_BUDGET)
    if Mp != M:
        x = jnp.pad(x, ((0, Mp - M), (0, 0)))
        residual = jnp.pad(residual, ((0, Mp - M), (0, 0)))
    b2 = b.reshape(1, N)
    g2 = gamma.reshape(1, N)
    bb2 = beta.reshape(1, N)

    out = pl.pallas_call(
        functools.partial(_matmul_bias_residual_ln_kernel, eps=eps),
        out_shape=jax.ShapeDtypeStruct((Mp, N), out_dtype),
        grid_spec=pltpu.PrefetchScalarGridSpec(
            num_scalar_prefetch=0,
            grid=(Mp // tm,),
            in_specs=[
                pl.BlockSpec((tm, K), lambda i: (i, 0)),
                pl.BlockSpec((K, N), lambda i: (0, 0)),
                pl.BlockSpec((1, N), lambda i: (0, 0)),
                pl.BlockSpec((tm, N), lambda i: (i, 0)),
                pl.BlockSpec((1, N), lambda i: (0, 0)),
                pl.BlockSpec((1, N), lambda i: (0, 0)),
            ],
            out_specs=pl.BlockSpec((tm, N), lambda i: (i, 0)),
        ),
        compiler_params=pltpu.CompilerParams(
            dimension_semantics=("parallel",),
            vmem_limit_bytes=_VMEM_LIMIT,
        ),
    )(x, w, b2, residual, g2, bb2)

    return out[:M] if Mp != M else out


# --------------------------------------------------------------------------
# Kernel 3: multi-head masked softmax attention, head-groups per grid step
# --------------------------------------------------------------------------
def _attention_kernel(q_ref, k_ref, v_ref, m_ref, o_ref, *, heads, head_dim, scale):
    mask = m_ref[0].astype(jnp.float32)            # (1, S) additive mask
    ctxs = []
    for h in range(heads):                         # static unroll over head group
        lo = h * head_dim
        qh = q_ref[0, :, lo:lo + head_dim].astype(jnp.float32)   # (S, dH)
        kh = k_ref[0, :, lo:lo + head_dim].astype(jnp.float32)
        vh = v_ref[0, :, lo:lo + head_dim]
        s = jax.lax.dot_general(qh, kh, (((1,), (1,)), ((), ())),
                                preferred_element_type=jnp.float32) * scale
        s = s + mask
        s = s - jnp.max(s, axis=-1, keepdims=True)
        p = jnp.exp(s)
        p = p / jnp.sum(p, axis=-1, keepdims=True)
        ctx = jnp.dot(p.astype(vh.dtype), vh, preferred_element_type=jnp.float32)
        ctxs.append(ctx)
    out = ctxs[0] if heads == 1 else jnp.concatenate(ctxs, axis=-1)
    o_ref[0] = out.astype(o_ref.dtype)             # single lane-dense store


def _pick_heads_per_block(num_heads, head_dim):
    for hb in range(num_heads, 0, -1):
        if num_heads % hb == 0 and (hb * head_dim) % 128 == 0 and hb * head_dim <= 512:
            return hb
    return None


def multi_head_attention(qkv, mask3d, *, num_heads, head_dim, scale):
    """qkv: [B, S, 3H] packed Q|K|V; mask3d: [B, 1, S] additive.  -> [B, S, H]."""
    # TODO(synk): full-sequence attention per (batch, head-group); very long
    # sequences would need a flash-attention style KV tiling + online softmax.
    B, S, threeH = qkv.shape
    H = num_heads * head_dim
    assert threeH == 3 * H
    out_dtype = qkv.dtype

    hb = _pick_heads_per_block(num_heads, head_dim)
    if hb is not None:
        # Block head-groups straight out of the packed 3H axis: no transposes,
        # no extra copies.  Q at block g, K at block nb+g, V at block 2*nb+g.
        nb = num_heads // hb
        blk = hb * head_dim
        q_spec = pl.BlockSpec((1, S, blk), lambda b, g: (b, 0, g))
        k_spec = pl.BlockSpec((1, S, blk), lambda b, g: (b, 0, nb + g))
        v_spec = pl.BlockSpec((1, S, blk), lambda b, g: (b, 0, 2 * nb + g))
        q_in, k_in, v_in = qkv, qkv, qkv
    else:
        # Small-H fallback: a head-group narrower than 128 lanes cannot tile the
        # packed 3H axis, so split Q/K/V (one copy each) and take all heads at once.
        hb = num_heads
        blk = H
        q_in = qkv[:, :, :H]
        k_in = qkv[:, :, H:2 * H]
        v_in = qkv[:, :, 2 * H:]
        q_spec = pl.BlockSpec((1, S, H), lambda b, g: (b, 0, g))
        k_spec = pl.BlockSpec((1, S, H), lambda b, g: (b, 0, g))
        v_spec = pl.BlockSpec((1, S, H), lambda b, g: (b, 0, g))

    return pl.pallas_call(
        functools.partial(_attention_kernel, heads=hb, head_dim=head_dim, scale=scale),
        out_shape=jax.ShapeDtypeStruct((B, S, H), out_dtype),
        grid_spec=pltpu.PrefetchScalarGridSpec(
            num_scalar_prefetch=0,
            grid=(B, num_heads // hb),
            in_specs=[q_spec, k_spec, v_spec,
                      pl.BlockSpec((1, 1, S), lambda b, g: (b, 0, 0))],
            out_specs=pl.BlockSpec((1, S, blk), lambda b, g: (b, 0, g)),
        ),
        compiler_params=pltpu.CompilerParams(
            dimension_semantics=("parallel", "parallel"),
            vmem_limit_bytes=_VMEM_LIMIT,
        ),
    )(q_in, k_in, v_in, mask3d)


# --------------------------------------------------------------------------
# BertLayer / BertEncoder composition
# --------------------------------------------------------------------------
def prepare_encoder_params(params, compute_dtype=None):
    """One-time prep OUTSIDE the jitted forward: fuse Q/K/V weights & biases and
    optionally pre-cast weight matrices (not biases / LN params) to bf16."""
    prepped = []
    for p in params:
        d = {
            "qkv_w": jnp.concatenate([p["q_w"], p["k_w"], p["v_w"]], axis=1),
            "qkv_b": jnp.concatenate([p["q_b"], p["k_b"], p["v_b"]], axis=0),
            "ao_w": p["ao_w"], "ao_b": p["ao_b"],
            "ln1_g": p["ln1_g"], "ln1_b": p["ln1_b"],
            "i_w": p["i_w"], "i_b": p["i_b"],
            "o_w": p["o_w"], "o_b": p["o_b"],
            "ln2_g": p["ln2_g"], "ln2_b": p["ln2_b"],
        }
        if compute_dtype is not None:
            for name in ("qkv_w", "ao_w", "i_w", "o_w"):
                d[name] = d[name].astype(compute_dtype)
        prepped.append(d)
    return prepped


def bert_layer(hidden, mask3d, p, *, num_heads):
    B, S, H = hidden.shape
    dH = H // num_heads
    x = hidden.reshape(B * S, H)

    # BertSelfAttention: fused Q/K/V projection (one matmul instead of three).
    qkv = matmul_bias_act(x, p["qkv_w"], p["qkv_b"]).reshape(B, S, 3 * H)

    # Attention: head-groups blocked straight out of [B, S, 3H]; output lands
    # directly in the merged [B, S, H] layout (== torch permute+view merge).
    ctx = multi_head_attention(qkv, mask3d, num_heads=num_heads, head_dim=dH,
                               scale=1.0 / math.sqrt(dH)).reshape(B * S, H)

    # BertSelfOutput: dense + residual + LayerNorm fused (dropout = identity, eval).
    attn = matmul_bias_residual_layernorm(ctx, p["ao_w"], p["ao_b"], x,
                                          p["ln1_g"], p["ln1_b"])
    # BertIntermediate: dense + exact erf-GELU epilogue.
    inter = matmul_bias_act(attn, p["i_w"], p["i_b"], activation="gelu")
    # BertOutput: dense + residual + LayerNorm fused.
    out = matmul_bias_residual_layernorm(inter, p["o_w"], p["o_b"], attn,
                                         p["ln2_g"], p["ln2_b"])
    return out.reshape(B, S, H)


@functools.partial(jax.jit, static_argnames=("num_heads",))
def bert_encoder_forward(hidden_states, attention_mask, prepped_params, *, num_heads):
    """BertEncoder.forward with output_all_encoded_layers=True (eval mode)."""
    # TODO(synk): nn.Dropout layers are identity in eval mode; training-mode
    # dropout (attention_probs / hidden) is not implemented.
    B, S, _ = hidden_states.shape
    mask3d = attention_mask.reshape(B, 1, S)  # additive mask, broadcast per head/row
    all_layers = []
    h = hidden_states
    for p in prepped_params:
        h = bert_layer(h, mask3d, p, num_heads=num_heads)
        all_layers.append(h)
    return all_layers


# --------------------------------------------------------------------------
# Pure-JAX reference (mirrors the torch module, eval mode)
# --------------------------------------------------------------------------
def _reference_encoder(hidden, attention_mask, params, num_heads):
    def layernorm(x, g, b, eps=1e-12):
        mu = x.mean(-1, keepdims=True)
        var = ((x - mu) ** 2).mean(-1, keepdims=True)
        return (x - mu) / jnp.sqrt(var + eps) * g + b

    def gelu(x):
        return x * 0.5 * (1.0 + jax.lax.erf(x / math.sqrt(2.0)))

    def lin(t, w, b):
        return jnp.dot(t, w) + b

    B, S, H = hidden.shape
    dH = H // num_heads
    outs = []
    h = hidden
    for p in params:
        x = h.reshape(B * S, H)
        q = lin(x, p["q_w"], p["q_b"]).reshape(B, S, num_heads, dH).transpose(0, 2, 1, 3)
        k = lin(x, p["k_w"], p["k_b"]).reshape(B, S, num_heads, dH).transpose(0, 2, 1, 3)
        v = lin(x, p["v_w"], p["v_b"]).reshape(B, S, num_heads, dH).transpose(0, 2, 1, 3)
        scores = jnp.einsum("bhqd,bhkd->bhqk", q, k) / math.sqrt(dH)
        scores = scores + attention_mask  # [B,1,1,S] broadcast
        probs = jax.nn.softmax(scores, axis=-1)
        ctx = jnp.einsum("bhqk,bhkd->bhqd", probs, v)
        ctx = ctx.transpose(0, 2, 1, 3).reshape(B * S, H)
        attn = layernorm(lin(ctx, p["ao_w"], p["ao_b"]) + x, p["ln1_g"], p["ln1_b"])
        inter = gelu(lin(attn, p["i_w"], p["i_b"]))
        out = layernorm(lin(inter, p["o_w"], p["o_b"]) + attn, p["ln2_g"], p["ln2_b"])
        h = out.reshape(B, S, H)
        outs.append(h)
    return outs


if __name__ == "__main__":
    # Small BERT-like config: batch=2, seq=8, hidden=32, heads=4, intermediate=128, 2 layers.
    B, S, H, NH, I, L = 2, 8, 32, 4, 128, 2

    key = jax.random.PRNGKey(0)
    key, kx, km = jax.random.split(key, 3)
    hidden = jax.random.normal(kx, (B, S, H), dtype=jnp.float32)

    # BERT-style extended attention mask: [B,1,1,S], 0 = keep, -10000 = masked.
    keep = (jax.random.uniform(km, (B, S)) > 0.25).astype(jnp.float32)
    keep = keep.at[:, 0].set(1.0)  # at least one visible token per example
    attention_mask = ((1.0 - keep) * -10000.0).reshape(B, 1, 1, S)

    def linear_init(k, fan_in, fan_out):
        kw, kb = jax.random.split(k)
        bound = 1.0 / math.sqrt(fan_in)
        w = jax.random.uniform(kw, (fan_in, fan_out), jnp.float32, -bound, bound)
        b = jax.random.uniform(kb, (fan_out,), jnp.float32, -bound, bound)
        return w, b

    params = []
    for _ in range(L):
        key, *ks = jax.random.split(key, 7)
        q_w, q_b = linear_init(ks[0], H, H)
        k_w, k_b = linear_init(ks[1], H, H)
        v_w, v_b = linear_init(ks[2], H, H)
        ao_w, ao_b = linear_init(ks[3], H, H)
        i_w, i_b = linear_init(ks[4], H, I)
        o_w, o_b = linear_init(ks[5], I, H)
        params.append(dict(
            q_w=q_w, q_b=q_b, k_w=k_w, k_b=k_b, v_w=v_w, v_b=v_b,
            ao_w=ao_w, ao_b=ao_b,
            ln1_g=jnp.ones((H,), jnp.float32), ln1_b=jnp.zeros((H,), jnp.float32),
            i_w=i_w, i_b=i_b, o_w=o_w, o_b=o_b,
            ln2_g=jnp.ones((H,), jnp.float32), ln2_b=jnp.zeros((H,), jnp.float32),
        ))

    # One-time param prep (QKV fusion; weights kept f32 here for the parity check).
    prepped = prepare_encoder_params(params, compute_dtype=None)

    outs = bert_encoder_forward(hidden, attention_mask, prepped, num_heads=NH)
    outs = jax.block_until_ready(outs)

    refs = _reference_encoder(hidden, attention_mask, params, NH)
    assert len(outs) == L
    # Tolerance accounts for default-precision (bf16 1-pass) MXU matmuls.
    for o, r in zip(outs, refs):
        assert o.shape == (B, S, H)
        assert jnp.allclose(o, r, atol=2e-2, rtol=2e-2), (
            f"mismatch vs reference, max abs diff {float(jnp.max(jnp.abs(o - r)))}"
        )

    print("KERNEL_OK")
</pallas_src>

<mosaic_0001>
module attributes {stable_mosaic.version = 11 : i64} {
  func.func @_matmul_bias_act_kernel(%arg0: i32, %arg1: i32, %arg2: memref<16x32xf32, #tpu.memory_space<vmem>>, %arg3: memref<32x96xf32, #tpu.memory_space<vmem>>, %arg4: memref<1x96xf32, #tpu.memory_space<vmem>>, %arg5: memref<16x96xf32, #tpu.memory_space<vmem>>) attributes {dimension_semantics = [#tpu.dimension_semantics<parallel>, #tpu.dimension_semantics<parallel>], iteration_bounds = array<i64: 1, 1>, scalar_prefetch = 0 : i64, scratch_operands = 0 : i64, tpu.core_type = #tpu.core_type<tc>, window_params = [{transform_indices = @transform_0, window_bounds = array<i64: 16, 32>}, {transform_indices = @transform_1, window_bounds = array<i64: 32, 96>}, {transform_indices = @transform_2, window_bounds = array<i64: 1, 96>}, {transform_indices = @transform_3, window_bounds = array<i64: 16, 96>}]} {
    %c0 = arith.constant 0 : index
    %c0_0 = arith.constant 0 : index
    %0 = vector.load %arg2[%c0, %c0_0] : memref<16x32xf32, #tpu.memory_space<vmem>>, vector<16x32xf32>
    %c0_1 = arith.constant 0 : index
    %c0_2 = arith.constant 0 : index
    %1 = vector.load %arg3[%c0_1, %c0_2] : memref<32x96xf32, #tpu.memory_space<vmem>>, vector<32x96xf32>
    %cst = arith.constant dense<0.000000e+00> : vector<16x96xf32>
    %2 = tpu.matmul %0, %1, %cst {dimension_numbers = #tpu.dot_dimension_numbers<[1], [0], [0], [1], [0, 0, 1, 1], [], []>} : vector<16x32xf32>, vector<32x96xf32>, vector<16x96xf32> -> vector<16x96xf32>
    %c0_3 = arith.constant 0 : index
    %c0_4 = arith.constant 0 : index
    %3 = vector.load %arg4[%c0_3, %c0_4] : memref<1x96xf32, #tpu.memory_space<vmem>>, vector<1x96xf32>
    %4 = vector.broadcast %3 : vector<1x96xf32> to vector<16x96xf32>
    %5 = arith.addf %2, %4 : vector<16x96xf32>
    %c0_5 = arith.constant 0 : index
    %c0_6 = arith.constant 0 : index
    %6 = vector.load %arg5[%c0_5, %c0_6] : memref<16x96xf32, #tpu.memory_space<vmem>>, vector<16x96xf32>
    tpu.vector_store %arg5[%c0_5, %c0_6], %5 {strides = array<i32>} : memref<16x96xf32, #tpu.memory_space<vmem>>, vector<16x96xf32>,
    return
  }
  func.func @transform_0(%arg0: i32, %arg1: i32) -> (i32, i32) {
    %c0_i32 = arith.constant 0 : i32
    %c0_i32_0 = arith.constant 0 : i32
    return %arg0, %c0_i32 : i32, i32
  }
  func.func @transform_1(%arg0: i32, %arg1: i32) -> (i32, i32) {
    %c0_i32 = arith.constant 0 : i32
    %c0_i32_0 = arith.constant 0 : i32
    return %c0_i32, %arg1 : i32, i32
  }
  func.func @transform_2(%arg0: i32, %arg1: i32) -> (i32, i32) {
    %c0_i32 = arith.constant 0 : i32
    %c0_i32_0 = arith.constant 0 : i32
    return %c0_i32, %arg1 : i32, i32
  }
  func.func @transform_3(%arg0: i32, %arg1: i32) -> (i32, i32) {
    %c0_i32 = arith.constant 0 : i32
    return %arg0, %arg1 : i32, i32
  }
}

module attributes {stable_mosaic.version = 11 : i64} {
  func.func @_attention_kernel(%arg0: i32, %arg1: i32, %arg2: memref<1x8x32xf32, #tpu.memory_space<vmem>>, %arg3: memref<1x8x32xf32, #tpu.memory_space<vmem>>, %arg4: memref<1x8x32xf32, #tpu.memory_space<vmem>>, %arg5: memref<1x1x8xf32, #tpu.memory_space<vmem>>, %arg6: memref<1x8x32xf32, #tpu.memory_space<vmem>>) attributes {dimension_semantics = [#tpu.dimension_semantics<parallel>, #tpu.dimension_semantics<parallel>], iteration_bounds = array<i64: 2, 1>, scalar_prefetch = 0 : i64, scratch_operands = 0 : i64, tpu.core_type = #tpu.core_type<tc>, window_params = [{transform_indices = @transform_0, window_bounds = array<i64: 1, 8, 32>}, {transform_indices = @transform_1, window_bounds = array<i64: 1, 8, 32>}, {transform_indices = @transform_2, window_bounds = array<i64: 1, 8, 32>}, {transform_indices = @transform_3, window_bounds = array<i64: 1, 1, 8>}, {transform_indices = @transform_4, window_bounds = array<i64: 1, 8, 32>}]} {
    %c0 = arith.constant 0 : index
    %c0_0 = arith.constant 0 : index
    %c0_1 = arith.constant 0 : index
    %0 = vector.load %arg5[%c0, %c0_0, %c0_1] : memref<1x1x8xf32, #tpu.memory_space<vmem>>, vector<1x1x8xf32>
    %1 = vector.shape_cast %0 : vector<1x1x8xf32> to vector<1x8xf32>
    %c0_2 = arith.constant 0 : index
    %c0_3 = arith.constant 0 : index
    %c0_4 = arith.constant 0 : index
    %2 = vector.load %arg2[%c0_2, %c0_3, %c0_4] : memref<1x8x32xf32, #tpu.memory_space<vmem>>, vector<1x8x8xf32>
    %3 = vector.shape_cast %2 : vector<1x8x8xf32> to vector<8x8xf32>
    %c0_5 = arith.constant 0 : index
    %c0_6 = arith.constant 0 : index
    %c0_7 = arith.constant 0 : index
    %4 = vector.load %arg3[%c0_5, %c0_6, %c0_7] : memref<1x8x32xf32, #tpu.memory_space<vmem>>, vector<1x8x8xf32>
    %5 = vector.shape_cast %4 : vector<1x8x8xf32> to vector<8x8xf32>
    %c0_8 = arith.constant 0 : index
    %c0_9 = arith.constant 0 : index
    %c0_10 = arith.constant 0 : index
    %6 = vector.load %arg4[%c0_8, %c0_9, %c0_10] : memref<1x8x32xf32, #tpu.memory_space<vmem>>, vector<1x8x8xf32>
    %7 = vector.shape_cast %6 : vector<1x8x8xf32> to vector<8x8xf32>
    %cst = arith.constant dense<0.000000e+00> : vector<8x8xf32>
    %8 = tpu.matmul %3, %5, %cst {dimension_numbers = #tpu.dot_dimension_numbers<[1], [1], [0], [0], [0, 0, 1, 0], [], []>} : vector<8x8xf32>, vector<8x8xf32>, vector<8x8xf32> -> vector<8x8xf32>
    %cst_11 = arith.constant 0.353553385 : f32
    %9 = vector.broadcast %cst_11 : f32 to vector<8x8xf32>
    %10 = arith.mulf %8, %9 : vector<8x8xf32>
    %11 = vector.broadcast %1 : vector<1x8xf32> to vector<8x8xf32>
    %12 = arith.addf %10, %11 : vector<8x8xf32>
    %cst_12 = arith.constant dense<0xFF800000> : vector<8xf32>
    %13 = vector.multi_reduction <maximumf>, %12, %cst_12 [1] : vector<8x8xf32> to vector<8xf32>
    %14 = vector.shape_cast %13 : vector<8xf32> to vector<8x1xf32>
    %15 = vector.broadcast %14 : vector<8x1xf32> to vector<8x8xf32>
    %16 = arith.subf %12, %15 : vector<8x8xf32>
    %17 = math.exp %16 : vector<8x8xf32>
    %cst_13 = arith.constant dense<0.000000e+00> : vector<8xf32>
    %18 = vector.multi_reduction <add>, %17, %cst_13 [1] : vector<8x8xf32> to vector<8xf32>
    %19 = vector.shape_cast %18 : vector<8xf32> to vector<8x1xf32>
    %20 = vector.broadcast %19 : vector<8x1xf32> to vector<8x8xf32>
    %21 = arith.divf %17, %20 : vector<8x8xf32>
    %cst_14 = arith.constant dense<0.000000e+00> : vector<8x8xf32>
    %22 = tpu.matmul %21, %7, %cst_14 {dimension_numbers = #tpu.dot_dimension_numbers<[1], [0], [0], [1], [0, 0, 1, 1], [], []>} : vector<8x8xf32>, vector<8x8xf32>, vector<8x8xf32> -> vector<8x8xf32>
    %c0_15 = arith.constant 0 : index
    %c0_16 = arith.constant 0 : index
    %c8 = arith.constant 8 : index
    %23 = vector.load %arg2[%c0_15, %c0_16, %c8] : memref<1x8x32xf32, #tpu.memory_space<vmem>>, vector<1x8x8xf32>
    %24 = vector.shape_cast %23 : vector<1x8x8xf32> to vector<8x8xf32>
    %c0_17 = arith.constant 0 : index
    %c0_18 = arith.constant 0 : index
    %c8_19 = arith.constant 8 : index
    %25 = vector.load %arg3[%c0_17, %c0_18, %c8_19] : memref<1x8x32xf32, #tpu.memory_space<vmem>>, vector<1x8x8xf32>
    %26 = vector.shape_cast %25 : vector<1x8x8xf32> to vector<8x8xf32>
    %c0_20 = arith.constant 0 : index
    %c0_21 = arith.constant 0 : index
    %c8_22 = arith.constant 8 : index
    %27 = vector.load %arg4[%c0_20, %c0_21, %c8_22] : memref<1x8x32xf32, #tpu.memory_space<vmem>>, vector<1x8x8xf32>
    %28 = vector.shape_cast %27 : vector<1x8x8xf32> to vector<8x8xf32>
    %cst_23 = arith.constant dense<0.000000e+00> : vector<8x8xf32>
    %29 = tpu.matmul %24, %26, %cst_23 {dimension_numbers = #tpu.dot_dimension_numbers<[1], [1], [0], [0], [0, 0, 1, 0], [], []>} : vector<8x8xf32>, vector<8x8xf32>, vector<8x8xf32> -> vector<8x8xf32>
    %cst_24 = arith.constant 0.353553385 : f32
    %30 = vector.broadcast %cst_24 : f32 to vector<8x8xf32>
    %31 = arith.mulf %29, %30 : vector<8x8xf32>
    %32 = vector.broadcast %1 : vector<1x8xf32> to vector<8x8xf32>
    %33 = arith.addf %31, %32 : vector<8x8xf32>
    %cst_25 = arith.constant dense<0xFF800000> : vector<8xf32>
    %34 = vector.multi_reduction <maximumf>, %33, %cst_25 [1] : vector<8x8xf32> to vector<8xf32>
    %35 = vector.shape_cast %34 : vector<8xf32> to vector<8x1xf32>
    %36 = vector.broadcast %35 : vector<8x1xf32> to vector<8x8xf32>
    %37 = arith.subf %33, %36 : vector<8x8xf32>
    %38 = math.exp %37 : vector<8x8xf32>
    %cst_26 = arith.constant dense<0.000000e+00> : vector<8xf32>
    %39 = vector.multi_reduction <add>, %38, %cst_26 [1] : vector<8x8xf32> to vector<8xf32>
    %40 = vector.shape_cast %39 : vector<8xf32> to vector<8x1xf32>
    %41 = vector.broadcast %40 : vector<8x1xf32> to vector<8x8xf32>
    %42 = arith.divf %38, %41 : vector<8x8xf32>
    %cst_27 = arith.constant dense<0.000000e+00> : vector<8x8xf32>
    %43 = tpu.matmul %42, %28, %cst_27 {dimension_numbers = #tpu.dot_dimension_numbers<[1], [0], [0], [1], [0, 0, 1, 1], [], []>} : vector<8x8xf32>, vector<8x8xf32>, vector<8x8xf32> -> vector<8x8xf32>
    %c0_28 = arith.constant 0 : index
    %c0_29 = arith.constant 0 : index
    %c16 = arith.constant 16 : index
    %44 = vector.load %arg2[%c0_28, %c0_29, %c16] : memref<1x8x32xf32, #tpu.memory_space<vmem>>, vector<1x8x8xf32>
    %45 = vector.shape_cast %44 : vector<1x8x8xf32> to vector<8x8xf32>
    %c0_30 = arith.constant 0 : index
    %c0_31 = arith.constant 0 : index
    %c16_32 = arith.constant 16 : index
    %46 = vector.load %arg3[%c0_30, %c0_31, %c16_32] : memref<1x8x32xf32, #tpu.memory_space<vmem>>, vector<1x8x8xf32>
    %47 = vector.shape_cast %46 : vector<1x8x8xf32> to vector<8x8xf32>
    %c0_33 = arith.constant 0 : index
    %c0_34 = arith.constant 0 : index
    %c16_35 = arith.constant 16 : index
    %48 = vector.load %arg4[%c0_33, %c0_34, %c16_35] : memref<1x8x32xf32, #tpu.memory_space<vmem>>, vector<1x8x8xf32>
    %49 = vector.shape_cast %48 : vector<1x8x8xf32> to vector<8x8xf32>
    %cst_36 = arith.constant dense<0.000000e+00> : vector<8x8xf32>
    %50 = tpu.matmul %45, %47, %cst_36 {dimension_numbers = #tpu.dot_dimension_numbers<[1], [1], [0], [0], [0, 0, 1, 0], [], []>} : vector<8x8xf32>, vector<8x8xf32>, vector<8x8xf32> -> vector<8x8xf32>
    %cst_37 = arith.constant 0.353553385 : f32
    %51 = vector.broadcast %cst_37 : f32 to vector<8x8xf32>
    %52 = arith.mulf %50, %51 : vector<8x8xf32>
    %53 = vector.broadcast %1 : vector<1x8xf32> to vector<8x8xf32>
    %54 = arith.addf %52, %53 : vector<8x8xf32>
    %cst_38 = arith.constant dense<0xFF800000> : vector<8xf32>
    %55 = vector.multi_reduction <maximumf>, %54, %cst_38 [1] : vector<8x8xf32> to vector<8xf32>
    %56 = vector.shape_cast %55 : vector<8xf32> to vector<8x1xf32>
    %57 = vector.broadcast %56 : vector<8x1xf32> to vector<8x8xf32>
    %58 = arith.subf %54, %57 : vector<8x8xf32>
    %59 = math.exp %58 : vector<8x8xf32>
    %cst_39 = arith.constant dense<0.000000e+00> : vector<8xf32>
    %60 = vector.multi_reduction <add>, %59, %cst_39 [1] : vector<8x8xf32> to vector<8xf32>
    %61 = vector.shape_cast %60 : vector<8xf32> to vector<8x1xf32>
    %62 = vector.broadcast %61 : vector<8x1xf32> to vector<8x8xf32>
    %63 = arith.divf %59, %62 : vector<8x8xf32>
    %cst_40 = arith.constant dense<0.000000e+00> : vector<8x8xf32>
    %64 = tpu.matmul %63, %49, %cst_40 {dimension_numbers = #tpu.dot_dimension_numbers<[1], [0], [0], [1], [0, 0, 1, 1], [], []>} : vector<8x8xf32>, vector<8x8xf32>, vector<8x8xf32> -> vector<8x8xf32>
    %c0_41 = arith.constant 0 : index
    %c0_42 = arith.constant 0 : index
    %c24 = arith.constant 24 : index
    %65 = vector.load %arg2[%c0_41, %c0_42, %c24] : memref<1x8x32xf32, #tpu.memory_space<vmem>>, vector<1x8x8xf32>
    %66 = vector.shape_cast %65 : vector<1x8x8xf32> to vector<8x8xf32>
    %c0_43 = arith.constant 0 : index
    %c0_44 = arith.constant 0 : index
    %c24_45 = arith.constant 24 : index
    %67 = vector.load %arg3[%c0_43, %c0_44, %c24_45] : memref<1x8x32xf32, #tpu.memory_space<vmem>>, vector<1x8x8xf32>
    %68 = vector.shape_cast %67 : vector<1x8x8xf32> to vector<8x8xf32>
    %c0_46 = arith.constant 0 : index
    %c0_47 = arith.constant 0 : index
    %c24_48 = arith.constant 24 : index
    %69 = vector.load %arg4[%c0_46, %c0_47, %c24_48] : memref<1x8x32xf32, #tpu.memory_space<vmem>>, vector<1x8x8xf32>
    %70 = vector.shape_cast %69 : vector<1x8x8xf32> to vector<8x8xf32>
    %cst_49 = arith.constant dense<0.000000e+00> : vector<8x8xf32>
    %71 = tpu.matmul %66, %68, %cst_49 {dimension_numbers = #tpu.dot_dimension_numbers<[1], [1], [0], [0], [0, 0, 1, 0], [], []>} : vector<8x8xf32>, vector<8x8xf32>, vector<8x8xf32> -> vector<8x8xf32>
    %cst_50 = arith.constant 0.353553385 : f32
    %72 = vector.broadcast %cst_50 : f32 to vector<8x8xf32>
    %73 = arith.mulf %71, %72 : vector<8x8xf32>
    %74 = vector.broadcast %1 : vector<1x8xf32> to vector<8x8xf32>
    %75 = arith.addf %73, %74 : vector<8x8xf32>
    %cst_51 = arith.constant dense<0xFF800000> : vector<8xf32>
    %76 = vector.multi_reduction <maximumf>, %75, %cst_51 [1] : vector<8x8xf32> to vector<8xf32>
    %77 = vector.shape_cast %76 : vector<8xf32> to vector<8x1xf32>
    %78 = vector.broadcast %77 : vector<8x1xf32> to vector<8x8xf32>
    %79 = arith.subf %75, %78 : vector<8x8xf32>
    %80 = math.exp %79 : vector<8x8xf32>
    %cst_52 = arith.constant dense<0.000000e+00> : vector<8xf32>
    %81 = vector.multi_reduction <add>, %80, %cst_52 [1] : vector<8x8xf32> to vector<8xf32>
    %82 = vector.shape_cast %81 : vector<8xf32> to vector<8x1xf32>
    %83 = vector.broadcast %82 : vector<8x1xf32> to vector<8x8xf32>
    %84 = arith.divf %80, %83 : vector<8x8xf32>
    %cst_53 = arith.constant dense<0.000000e+00> : vector<8x8xf32>
    %85 = tpu.matmul %84, %70, %cst_53 {dimension_numbers = #tpu.dot_dimension_numbers<[1], [0], [0], [1], [0, 0, 1, 1], [], []>} : vector<8x8xf32>, vector<8x8xf32>, vector<8x8xf32> -> vector<8x8xf32>
    %86 = tpu.concatenate %22, %43, %64, %85 in 1 : vector<8x8xf32>, vector<8x8xf32>, vector<8x8xf32>, vector<8x8xf32> -> vector<8x32xf32>
    %c0_54 = arith.constant 0 : index
    %c0_55 = arith.constant 0 : index
    %c0_56 = arith.constant 0 : index
    %87 = vector.load %arg6[%c0_54, %c0_55, %c0_56] : memref<1x8x32xf32, #tpu.memory_space<vmem>>, vector<1x8x32xf32>
    %88 = vector.shape_cast %87 : vector<1x8x32xf32> to vector<8x32xf32>
    %89 = vector.shape_cast %86 : vector<8x32xf32> to vector<1x8x32xf32>
    tpu.vector_store %arg6[%c0_54, %c0_55, %c0_56], %89 {strides = array<i32>} : memref<1x8x32xf32, #tpu.memory_space<vmem>>, vector<1x8x32xf32>,
    return
  }
  func.func @transform_0(%arg0: i32, %arg1: i32) -> (i32, i32, i32) {
    %c0_i32 = arith.constant 0 : i32
    %c0_i32_0 = arith.constant 0 : i32
    return %arg0, %c0_i32, %arg1 : i32, i32, i32
  }
  func.func @transform_1(%arg0: i32, %arg1: i32) -> (i32, i32, i32) {
    %c0_i32 = arith.constant 0 : i32
    %c0_i32_0 = arith.constant 0 : i32
    return %arg0, %c0_i32, %arg1 : i32, i32, i32
  }
  func.func @transform_2(%arg0: i32, %arg1: i32) -> (i32, i32, i32) {
    %c0_i32 = arith.constant 0 : i32
    %c0_i32_0 = arith.constant 0 : i32
    return %arg0, %c0_i32, %arg1 : i32, i32, i32
  }
  func.func @transform_3(%arg0: i32, %arg1: i32) -> (i32, i32, i32) {
    %c0_i32 = arith.constant 0 : i32
    %c0_i32_0 = arith.constant 0 : i32
    %c0_i32_1 = arith.constant 0 : i32
    return %arg0, %c0_i32, %c0_i32_0 : i32, i32, i32
  }
  func.func @transform_4(%arg0: i32, %arg1: i32) -> (i32, i32, i32) {
    %c0_i32 = arith.constant 0 : i32
    %c0_i32_0 = arith.constant 0 : i32
    return %arg0, %c0_i32, %arg1 : i32, i32, i32
  }
}

module attributes {stable_mosaic.version = 11 : i64} {
  func.func @_matmul_bias_residual_ln_kernel(%arg0: i32, %arg1: memref<16x32xf32, #tpu.memory_space<vmem>>, %arg2: memref<32x32xf32, #tpu.memory_space<vmem>>, %arg3: memref<1x32xf32, #tpu.memory_space<vmem>>, %arg4: memref<16x32xf32, #tpu.memory_space<vmem>>, %arg5: memref<1x32xf32, #tpu.memory_space<vmem>>, %arg6: memref<1x32xf32, #tpu.memory_space<vmem>>, %arg7: memref<16x32xf32, #tpu.memory_space<vmem>>) attributes {dimension_semantics = [#tpu.dimension_semantics<parallel>], iteration_bounds = array<i64: 1>, scalar_prefetch = 0 : i64, scratch_operands = 0 : i64, tpu.core_type = #tpu.core_type<tc>, window_params = [{transform_indices = @transform_0, window_bounds = array<i64: 16, 32>}, {pipeline_mode = #tpu.pipeline_mode<synchronous>, transform_indices = @transform_1, window_bounds = array<i64: 32, 32>}, {pipeline_mode = #tpu.pipeline_mode<synchronous>, transform_indices = @transform_2, window_bounds = array<i64: 1, 32>}, {transform_indices = @transform_3, window_bounds = array<i64: 16, 32>}, {pipeline_mode = #tpu.pipeline_mode<synchronous>, transform_indices = @transform_4, window_bounds = array<i64: 1, 32>}, {pipeline_mode = #tpu.pipeline_mode<synchronous>, transform_indices = @transform_5, window_bounds = array<i64: 1, 32>}, {transform_indices = @transform_6, window_bounds = array<i64: 16, 32>}]} {
    %c0 = arith.constant 0 : index
    %c0_0 = arith.constant 0 : index
    %0 = vector.load %arg1[%c0, %c0_0] : memref<16x32xf32, #tpu.memory_space<vmem>>, vector<16x32xf32>
    %c0_1 = arith.constant 0 : index
    %c0_2 = arith.constant 0 : index
    %1 = vector.load %arg2[%c0_1, %c0_2] : memref<32x32xf32, #tpu.memory_space<vmem>>, vector<32x32xf32>
    %cst = arith.constant dense<0.000000e+00> : vector<16x32xf32>
    %2 = tpu.matmul %0, %1, %cst {dimension_numbers = #tpu.dot_dimension_numbers<[1], [0], [0], [1], [0, 0, 1, 1], [], []>} : vector<16x32xf32>, vector<32x32xf32>, vector<16x32xf32> -> vector<16x32xf32>
    %c0_3 = arith.constant 0 : index
    %c0_4 = arith.constant 0 : index
    %3 = vector.load %arg3[%c0_3, %c0_4] : memref<1x32xf32, #tpu.memory_space<vmem>>, vector<1x32xf32>
    %4 = vector.broadcast %3 : vector<1x32xf32> to vector<16x32xf32>
    %5 = arith.addf %2, %4 : vector<16x32xf32>
    %c0_5 = arith.constant 0 : index
    %c0_6 = arith.constant 0 : index
    %6 = vector.load %arg4[%c0_5, %c0_6] : memref<16x32xf32, #tpu.memory_space<vmem>>, vector<16x32xf32>
    %7 = arith.addf %5, %6 : vector<16x32xf32>
    %cst_7 = arith.constant dense<0.000000e+00> : vector<16xf32>
    %8 = vector.multi_reduction <add>, %7, %cst_7 [1] : vector<16x32xf32> to vector<16xf32>
    %9 = vector.shape_cast %8 : vector<16xf32> to vector<16x1xf32>
    %cst_8 = arith.constant 3.200000e+01 : f32
    %10 = vector.broadcast %cst_8 : f32 to vector<16x1xf32>
    %11 = arith.divf %9, %10 : vector<16x1xf32>
    %12 = vector.broadcast %11 : vector<16x1xf32> to vector<16x32xf32>
    %13 = arith.subf %7, %12 : vector<16x32xf32>
    %14 = arith.mulf %13, %13 : vector<16x32xf32>
    %cst_9 = arith.constant dense<0.000000e+00> : vector<16xf32>
    %15 = vector.multi_reduction <add>, %14, %cst_9 [1] : vector<16x32xf32> to vector<16xf32>
    %16 = vector.shape_cast %15 : vector<16xf32> to vector<16x1xf32>
    %cst_10 = arith.constant 3.200000e+01 : f32
    %17 = vector.broadcast %cst_10 : f32 to vector<16x1xf32>
    %18 = arith.divf %16, %17 : vector<16x1xf32>
    %cst_11 = arith.constant 9.99999996E-13 : f32
    %19 = vector.broadcast %cst_11 : f32 to vector<16x1xf32>
    %20 = arith.addf %18, %19 : vector<16x1xf32>
    %21 = math.rsqrt %20 : vector<16x1xf32>
    %22 = vector.broadcast %21 : vector<16x1xf32> to vector<16x32xf32>
    %23 = arith.mulf %13, %22 : vector<16x32xf32>
    %c0_12 = arith.constant 0 : index
    %c0_13 = arith.constant 0 : index
    %24 = vector.load %arg5[%c0_12, %c0_13] : memref<1x32xf32, #tpu.memory_space<vmem>>, vector<1x32xf32>
    %25 = vector.broadcast %24 : vector<1x32xf32> to vector<16x32xf32>
    %26 = arith.mulf %23, %25 : vector<16x32xf32>
    %c0_14 = arith.constant 0 : index
    %c0_15 = arith.constant 0 : index
    %27 = vector.load %arg6[%c0_14, %c0_15] : memref<1x32xf32, #tpu.memory_space<vmem>>, vector<1x32xf32>
    %28 = vector.broadcast %27 : vector<1x32xf32> to vector<16x32xf32>
    %29 = arith.addf %26, %28 : vector<16x32xf32>
    %c0_16 = arith.constant 0 : index
    %c0_17 = arith.constant 0 : index
    %30 = vector.load %arg7[%c0_16, %c0_17] : memref<16x32xf32, #tpu.memory_space<vmem>>, vector<16x32xf32>
    tpu.vector_store %arg7[%c0_16, %c0_17], %29 {strides = array<i32>} : memref<16x32xf32, #tpu.memory_space<vmem>>, vector<16x32xf32>,
    return
  }
  func.func @transform_0(%arg0: i32) -> (i32, i32) {
    %c0_i32 = arith.constant 0 : i32
    %c0_i32_0 = arith.constant 0 : i32
    return %arg0, %c0_i32 : i32, i32
  }
  func.func @transform_1(%arg0: i32) -> (i32, i32) {
    %c0_i32 = arith.constant 0 : i32
    %c0_i32_0 = arith.constant 0 : i32
    %c0_i32_1 = arith.constant 0 : i32
    return %c0_i32, %c0_i32_0 : i32, i32
  }
  func.func @transform_2(%arg0: i32) -> (i32, i32) {
    %c0_i32 = arith.constant 0 : i32
    %c0_i32_0 = arith.constant 0 : i32
    %c0_i32_1 = arith.constant 0 : i32
    return %c0_i32, %c0_i32_0 : i32, i32
  }
  func.func @transform_3(%arg0: i32) -> (i32, i32) {
    %c0_i32 = arith.constant 0 : i32
    %c0_i32_0 = arith.constant 0 : i32
    return %arg0, %c0_i32 : i32, i32
  }
  func.func @transform_4(%arg0: i32) -> (i32, i32) {
    %c0_i32 = arith.constant 0 : i32
    %c0_i32_0 = arith.constant 0 : i32
    %c0_i32_1 = arith.constant 0 : i32
    return %c0_i32, %c0_i32_0 : i32, i32
  }
  func.func @transform_5(%arg0: i32) -> (i32, i32) {
    %c0_i32 = arith.constant 0 : i32
    %c0_i32_0 = arith.constant 0 : i32
    %c0_i32_1 = arith.constant 0 : i32
    return %c0_i32, %c0_i32_0 : i32, i32
  }
  func.func @transform_6(%arg0: i32) -> (i32, i32) {
    %c0_i32 = arith.constant 0 : i32
    %c0_i32_0 = arith.constant 0 : i32
    return %arg0, %c0_i32 : i32, i32
  }
}

module attributes {stable_mosaic.version = 11 : i64} {
  func.func @_matmul_bias_act_kernel(%arg0: i32, %arg1: i32, %arg2: memref<16x32xf32, #tpu.memory_space<vmem>>, %arg3: memref<32x128xf32, #tpu.memory_space<vmem>>, %arg4: memref<1x128xf32, #tpu.memory_space<vmem>>, %arg5: memref<16x128xf32, #tpu.memory_space<vmem>>) attributes {dimension_semantics = [#tpu.dimension_semantics<parallel>, #tpu.dimension_semantics<parallel>], iteration_bounds = array<i64: 1, 1>, scalar_prefetch = 0 : i64, scratch_operands = 0 : i64, tpu.core_type = #tpu.core_type<tc>, window_params = [{transform_indices = @transform_0, window_bounds = array<i64: 16, 32>}, {transform_indices = @transform_1, window_bounds = array<i64: 32, 128>}, {transform_indices = @transform_2, window_bounds = array<i64: 1, 128>}, {transform_indices = @transform_3, window_bounds = array<i64: 16, 128>}]} {
    %c0 = arith.constant 0 : index
    %c0_0 = arith.constant 0 : index
    %0 = vector.load %arg2[%c0, %c0_0] : memref<16x32xf32, #tpu.memory_space<vmem>>, vector<16x32xf32>
    %c0_1 = arith.constant 0 : index
    %c0_2 = arith.constant 0 : index
    %1 = vector.load %arg3[%c0_1, %c0_2] : memref<32x128xf32, #tpu.memory_space<vmem>>, vector<32x128xf32>
    %cst = arith.constant dense<0.000000e+00> : vector<16x128xf32>
    %2 = tpu.matmul %0, %1, %cst {dimension_numbers = #tpu.dot_dimension_numbers<[1], [0], [0], [1], [0, 0, 1, 1], [], []>} : vector<16x32xf32>, vector<32x128xf32>, vector<16x128xf32> -> vector<16x128xf32>
    %c0_3 = arith.constant 0 : index
    %c0_4 = arith.constant 0 : index
    %3 = vector.load %arg4[%c0_3, %c0_4] : memref<1x128xf32, #tpu.memory_space<vmem>>, vector<1x128xf32>
    %4 = vector.broadcast %3 : vector<1x128xf32> to vector<16x128xf32>
    %5 = arith.addf %2, %4 : vector<16x128xf32>
    %cst_5 = arith.constant 5.000000e-01 : f32
    %6 = vector.broadcast %cst_5 : f32 to vector<16x128xf32>
    %7 = arith.mulf %5, %6 : vector<16x128xf32>
    %cst_6 = arith.constant 0.707106769 : f32
    %8 = vector.broadcast %cst_6 : f32 to vector<16x128xf32>
    %9 = arith.mulf %5, %8 : vector<16x128xf32>
    %10 = math.erf %9 : vector<16x128xf32>
    %cst_7 = arith.constant 1.000000e+00 : f32
    %11 = vector.broadcast %cst_7 : f32 to vector<16x128xf32>
    %12 = arith.addf %11, %10 : vector<16x128xf32>
    %13 = arith.mulf %7, %12 : vector<16x128xf32>
    %c0_8 = arith.constant 0 : index
    %c0_9 = arith.constant 0 : index
    %14 = vector.load %arg5[%c0_8, %c0_9] : memref<16x128xf32, #tpu.memory_space<vmem>>, vector<16x128xf32>
    tpu.vector_store %arg5[%c0_8, %c0_9], %13 {strides = array<i32>} : memref<16x128xf32, #tpu.memory_space<vmem>>, vector<16x128xf32>,
    return
  }
  func.func @transform_0(%arg0: i32, %arg1: i32) -> (i32, i32) {
    %c0_i32 = arith.constant 0 : i32
    %c0_i32_0 = arith.constant 0 : i32
    return %arg0, %c0_i32 : i32, i32
  }
  func.func @transform_1(%arg0: i32, %arg1: i32) -> (i32, i32) {
    %c0_i32 = arith.constant 0 : i32
    %c0_i32_0 = arith.constant 0 : i32
    return %c0_i32, %arg1 : i32, i32
  }
  func.func @transform_2(%arg0: i32, %arg1: i32) -> (i32, i32) {
    %c0_i32 = arith.constant 0 : i32
    %c0_i32_0 = arith.constant 0 : i32
    return %c0_i32, %arg1 : i32, i32
  }
  func.func @transform_3(%arg0: i32, %arg1: i32) -> (i32, i32) {
    %c0_i32 = arith.constant 0 : i32
    return %arg0, %arg1 : i32, i32
  }
}

module attributes {stable_mosaic.version = 11 : i64} {
  func.func @_matmul_bias_residual_ln_kernel(%arg0: i32, %arg1: memref<16x128xf32, #tpu.memory_space<vmem>>, %arg2: memref<128x32xf32, #tpu.memory_space<vmem>>, %arg3: memref<1x32xf32, #tpu.memory_space<vmem>>, %arg4: memref<16x32xf32, #tpu.memory_space<vmem>>, %arg5: memref<1x32xf32, #tpu.memory_space<vmem>>, %arg6: memref<1x32xf32, #tpu.memory_space<vmem>>, %arg7: memref<16x32xf32, #tpu.memory_space<vmem>>) attributes {dimension_semantics = [#tpu.dimension_semantics<parallel>], iteration_bounds = array<i64: 1>, scalar_prefetch = 0 : i64, scratch_operands = 0 : i64, tpu.core_type = #tpu.core_type<tc>, window_params = [{transform_indices = @transform_0, window_bounds = array<i64: 16, 128>}, {pipeline_mode = #tpu.pipeline_mode<synchronous>, transform_indices = @transform_1, window_bounds = array<i64: 128, 32>}, {pipeline_mode = #tpu.pipeline_mode<synchronous>, transform_indices = @transform_2, window_bounds = array<i64: 1, 32>}, {transform_indices = @transform_3, window_bounds = array<i64: 16, 32>}, {pipeline_mode = #tpu.pipeline_mode<synchronous>, transform_indices = @transform_4, window_bounds = array<i64: 1, 32>}, {pipeline_mode = #tpu.pipeline_mode<synchronous>, transform_indices = @transform_5, window_bounds = array<i64: 1, 32>}, {transform_indices = @transform_6, window_bounds = array<i64: 16, 32>}]} {
    %c0 = arith.constant 0 : index
    %c0_0 = arith.constant 0 : index
    %0 = vector.load %arg1[%c0, %c0_0] : memref<16x128xf32, #tpu.memory_space<vmem>>, vector<16x128xf32>
    %c0_1 = arith.constant 0 : index
    %c0_2 = arith.constant 0 : index
    %1 = vector.load %arg2[%c0_1, %c0_2] : memref<128x32xf32, #tpu.memory_space<vmem>>, vector<128x32xf32>
    %cst = arith.constant dense<0.000000e+00> : vector<16x32xf32>
    %2 = tpu.matmul %0, %1, %cst {dimension_numbers = #tpu.dot_dimension_numbers<[1], [0], [0], [1], [0, 0, 1, 1], [], []>} : vector<16x128xf32>, vector<128x32xf32>, vector<16x32xf32> -> vector<16x32xf32>
    %c0_3 = arith.constant 0 : index
    %c0_4 = arith.constant 0 : index
    %3 = vector.load %arg3[%c0_3, %c0_4] : memref<1x32xf32, #tpu.memory_space<vmem>>, vector<1x32xf32>
    %4 = vector.broadcast %3 : vector<1x32xf32> to vector<16x32xf32>
    %5 = arith.addf %2, %4 : vector<16x32xf32>
    %c0_5 = arith.constant 0 : index
    %c0_6 = arith.constant 0 : index
    %6 = vector.load %arg4[%c0_5, %c0_6] : memref<16x32xf32, #tpu.memory_space<vmem>>, vector<16x32xf32>
    %7 = arith.addf %5, %6 : vector<16x32xf32>
    %cst_7 = arith.constant dense<0.000000e+00> : vector<16xf32>
    %8 = vector.multi_reduction <add>, %7, %cst_7 [1] : vector<16x32xf32> to vector<16xf32>
    %9 = vector.shape_cast %8 : vector<16xf32> to vector<16x1xf32>
    %cst_8 = arith.constant 3.200000e+01 : f32
    %10 = vector.broadcast %cst_8 : f32 to vector<16x1xf32>
    %11 = arith.divf %9, %10 : vector<16x1xf32>
    %12 = vector.broadcast %11 : vector<16x1xf32> to vector<16x32xf32>
    %13 = arith.subf %7, %12 : vector<16x32xf32>
    %14 = arith.mulf %13, %13 : vector<16x32xf32>
    %cst_9 = arith.constant dense<0.000000e+00> : vector<16xf32>
    %15 = vector.multi_reduction <add>, %14, %cst_9 [1] : vector<16x32xf32> to vector<16xf32>
    %16 = vector.shape_cast %15 : vector<16xf32> to vector<16x1xf32>
    %cst_10 = arith.constant 3.200000e+01 : f32
    %17 = vector.broadcast %cst_10 : f32 to vector<16x1xf32>
    %18 = arith.divf %16, %17 : vector<16x1xf32>
    %cst_11 = arith.constant 9.99999996E-13 : f32
    %19 = vector.broadcast %cst_11 : f32 to vector<16x1xf32>
    %20 = arith.addf %18, %19 : vector<16x1xf32>
    %21 = math.rsqrt %20 : vector<16x1xf32>
    %22 = vector.broadcast %21 : vector<16x1xf32> to vector<16x32xf32>
    %23 = arith.mulf %13, %22 : vector<16x32xf32>
    %c0_12 = arith.constant 0 : index
    %c0_13 = arith.constant 0 : index
    %24 = vector.load %arg5[%c0_12, %c0_13] : memref<1x32xf32, #tpu.memory_space<vmem>>, vector<1x32xf32>
    %25 = vector.broadcast %24 : vector<1x32xf32> to vector<16x32xf32>
    %26 = arith.mulf %23, %25 : vector<16x32xf32>
    %c0_14 = arith.constant 0 : index
    %c0_15 = arith.constant 0 : index
    %27 = vector.load %arg6[%c0_14, %c0_15] : memref<1x32xf32, #tpu.memory_space<vmem>>, vector<1x32xf32>
    %28 = vector.broadcast %27 : vector<1x32xf32> to vector<16x32xf32>
    %29 = arith.addf %26, %28 : vector<16x32xf32>
    %c0_16 = arith.constant 0 : index
    %c0_17 = arith.constant 0 : index
    %30 = vector.load %arg7[%c0_16, %c0_17] : memref<16x32xf32, #tpu.memory_space<vmem>>, vector<16x32xf32>
    tpu.vector_store %arg7[%c0_16, %c0_17], %29 {strides = array<i32>} : memref<16x32xf32, #tpu.memory_space<vmem>>, vector<16x32xf32>,
    return
  }
  func.func @transform_0(%arg0: i32) -> (i32, i32) {
    %c0_i32 = arith.constant 0 : i32
    %c0_i32_0 = arith.constant 0 : i32
    return %arg0, %c0_i32 : i32, i32
  }
  func.func @transform_1(%arg0: i32) -> (i32, i32) {
    %c0_i32 = arith.constant 0 : i32
    %c0_i32_0 = arith.constant 0 : i32
    %c0_i32_1 = arith.constant 0 : i32
    return %c0_i32, %c0_i32_0 : i32, i32
  }
  func.func @transform_2(%arg0: i32) -> (i32, i32) {
    %c0_i32 = arith.constant 0 : i32
    %c0_i32_0 = arith.constant 0 : i32
    %c0_i32_1 = arith.constant 0 : i32
    return %c0_i32, %c0_i32_0 : i32, i32
  }
  func.func @transform_3(%arg0: i32) -> (i32, i32) {
    %c0_i32 = arith.constant 0 : i32
    %c0_i32_0 = arith.constant 0 : i32
    return %arg0, %c0_i32 : i32, i32
  }
  func.func @transform_4(%arg0: i32) -> (i32, i32) {
    %c0_i32 = arith.constant 0 : i32
    %c0_i32_0 = arith.constant 0 : i32
    %c0_i32_1 = arith.constant 0 : i32
    return %c0_i32, %c0_i32_0 : i32, i32
  }
  func.func @transform_5(%arg0: i32) -> (i32, i32) {
    %c0_i32 = arith.constant 0 : i32
    %c0_i32_0 = arith.constant 0 : i32
    %c0_i32_1 = arith.constant 0 : i32
    return %c0_i32, %c0_i32_0 : i32, i32
  }
  func.func @transform_6(%arg0: i32) -> (i32, i32) {
    %c0_i32 = arith.constant 0 : i32
    %c0_i32_0 = arith.constant 0 : i32
    return %arg0, %c0_i32 : i32, i32
  }
}

module attributes {stable_mosaic.version = 11 : i64} {
  func.func @_matmul_bias_act_kernel(%arg0: i32, %arg1: i32, %arg2: memref<16x32xf32, #tpu.memory_space<vmem>>, %arg3: memref<32x96xf32, #tpu.memory_space<vmem>>, %arg4: memref<1x96xf32, #tpu.memory_space<vmem>>, %arg5: memref<16x96xf32, #tpu.memory_space<vmem>>) attributes {dimension_semantics = [#tpu.dimension_semantics<parallel>, #tpu.dimension_semantics<parallel>], iteration_bounds = array<i64: 1, 1>, scalar_prefetch = 0 : i64, scratch_operands = 0 : i64, tpu.core_type = #tpu.core_type<tc>, window_params = [{transform_indices = @transform_0, window_bounds = array<i64: 16, 32>}, {transform_indices = @transform_1, window_bounds = array<i64: 32, 96>}, {transform_indices = @transform_2, window_bounds = array<i64: 1, 96>}, {transform_indices = @transform_3, window_bounds = array<i64: 16, 96>}]} {
    %c0 = arith.constant 0 : index
    %c0_0 = arith.constant 0 : index
    %0 = vector.load %arg2[%c0, %c0_0] : memref<16x32xf32, #tpu.memory_space<vmem>>, vector<16x32xf32>
    %c0_1 = arith.constant 0 : index
    %c0_2 = arith.constant 0 : index
    %1 = vector.load %arg3[%c0_1, %c0_2] : memref<32x96xf32, #tpu.memory_space<vmem>>, vector<32x96xf32>
    %cst = arith.constant dense<0.000000e+00> : vector<16x96xf32>
    %2 = tpu.matmul %0, %1, %cst {dimension_numbers = #tpu.dot_dimension_numbers<[1], [0], [0], [1], [0, 0, 1, 1], [], []>} : vector<16x32xf32>, vector<32x96xf32>, vector<16x96xf32> -> vector<16x96xf32>
    %c0_3 = arith.constant 0 : index
    %c0_4 = arith.constant 0 : index
    %3 = vector.load %arg4[%c0_3, %c0_4] : memref<1x96xf32, #tpu.memory_space<vmem>>, vector<1x96xf32>
    %4 = vector.broadcast %3 : vector<1x96xf32> to vector<16x96xf32>
    %5 = arith.addf %2, %4 : vector<16x96xf32>
    %c0_5 = arith.constant 0 : index
    %c0_6 = arith.constant 0 : index
    %6 = vector.load %arg5[%c0_5, %c0_6] : memref<16x96xf32, #tpu.memory_space<vmem>>, vector<16x96xf32>
    tpu.vector_store %arg5[%c0_5, %c0_6], %5 {strides = array<i32>} : memref<16x96xf32, #tpu.memory_space<vmem>>, vector<16x96xf32>,
    return
  }
  func.func @transform_0(%arg0: i32, %arg1: i32) -> (i32, i32) {
    %c0_i32 = arith.constant 0 : i32
    %c0_i32_0 = arith.constant 0 : i32
    return %arg0, %c0_i32 : i32, i32
  }
  func.func @transform_1(%arg0: i32, %arg1: i32) -> (i32, i32) {
    %c0_i32 = arith.constant 0 : i32
    %c0_i32_0 = arith.constant 0 : i32
    return %c0_i32, %arg1 : i32, i32
  }
  func.func @transform_2(%arg0: i32, %arg1: i32) -> (i32, i32) {
    %c0_i32 = arith.constant 0 : i32
    %c0_i32_0 = arith.constant 0 : i32
    return %c0_i32, %arg1 : i32, i32
  }
  func.func @transform_3(%arg0: i32, %arg1: i32) -> (i32, i32) {
    %c0_i32 = arith.constant 0 : i32
    return %arg0, %arg1 : i32, i32
  }
}

module attributes {stable_mosaic.version = 11 : i64} {
  func.func @_matmul_bias_residual_ln_kernel(%arg0: i32, %arg1: memref<16x128xf32, #tpu.memory_space<vmem>>, %arg2: memref<128x32xf32, #tpu.memory_space<vmem>>, %arg3: memref<1x32xf32, #tpu.memory_space<vmem>>, %arg4: memref<16x32xf32, #tpu.memory_space<vmem>>, %arg5: memref<1x32xf32, #tpu.memory_space<vmem>>, %arg6: memref<1x32xf32, #tpu.memory_space<vmem>>, %arg7: memref<16x32xf32, #tpu.memory_space<vmem>>) attributes {dimension_semantics = [#tpu.dimension_semantics<parallel>], iteration_bounds = array<i64: 1>, scalar_prefetch = 0 : i64, scratch_operands = 0 : i64, tpu.core_type = #tpu.core_type<tc>, window_params = [{transform_indices = @transform_0, window_bounds = array<i64: 16, 128>}, {pipeline_mode = #tpu.pipeline_mode<synchronous>, transform_indices = @transform_1, window_bounds = array<i64: 128, 32>}, {pipeline_mode = #tpu.pipeline_mode<synchronous>, transform_indices = @transform_2, window_bounds = array<i64: 1, 32>}, {transform_indices = @transform_3, window_bounds = array<i64: 16, 32>}, {pipeline_mode = #tpu.pipeline_mode<synchronous>, transform_indices = @transform_4, window_bounds = array<i64: 1, 32>}, {pipeline_mode = #tpu.pipeline_mode<synchronous>, transform_indices = @transform_5, window_bounds = array<i64: 1, 32>}, {transform_indices = @transform_6, window_bounds = array<i64: 16, 32>}]} {
    %c0 = arith.constant 0 : index
    %c0_0 = arith.constant 0 : index
    %0 = vector.load %arg1[%c0, %c0_0] : memref<16x128xf32, #tpu.memory_space<vmem>>, vector<16x128xf32>
    %c0_1 = arith.constant 0 : index
    %c0_2 = arith.constant 0 : index
    %1 = vector.load %arg2[%c0_1, %c0_2] : memref<128x32xf32, #tpu.memory_space<vmem>>, vector<128x32xf32>
    %cst = arith.constant dense<0.000000e+00> : vector<16x32xf32>
    %2 = tpu.matmul %0, %1, %cst {dimension_numbers = #tpu.dot_dimension_numbers<[1], [0], [0], [1], [0, 0, 1, 1], [], []>} : vector<16x128xf32>, vector<128x32xf32>, vector<16x32xf32> -> vector<16x32xf32>
    %c0_3 = arith.constant 0 : index
    %c0_4 = arith.constant 0 : index
    %3 = vector.load %arg3[%c0_3, %c0_4] : memref<1x32xf32, #tpu.memory_space<vmem>>, vector<1x32xf32>
    %4 = vector.broadcast %3 : vector<1x32xf32> to vector<16x32xf32>
    %5 = arith.addf %2, %4 : vector<16x32xf32>
    %c0_5 = arith.constant 0 : index
    %c0_6 = arith.constant 0 : index
    %6 = vector.load %arg4[%c0_5, %c0_6] : memref<16x32xf32, #tpu.memory_space<vmem>>, vector<16x32xf32>
    %7 = arith.addf %5, %6 : vector<16x32xf32>
    %cst_7 = arith.constant dense<0.000000e+00> : vector<16xf32>
    %8 = vector.multi_reduction <add>, %7, %cst_7 [1] : vector<16x32xf32> to vector<16xf32>
    %9 = vector.shape_cast %8 : vector<16xf32> to vector<16x1xf32>
    %cst_8 = arith.constant 3.200000e+01 : f32
    %10 = vector.broadcast %cst_8 : f32 to vector<16x1xf32>
    %11 = arith.divf %9, %10 : vector<16x1xf32>
    %12 = vector.broadcast %11 : vector<16x1xf32> to vector<16x32xf32>
    %13 = arith.subf %7, %12 : vector<16x32xf32>
    %14 = arith.mulf %13, %13 : vector<16x32xf32>
    %cst_9 = arith.constant dense<0.000000e+00> : vector<16xf32>
    %15 = vector.multi_reduction <add>, %14, %cst_9 [1] : vector<16x32xf32> to vector<16xf32>
    %16 = vector.shape_cast %15 : vector<16xf32> to vector<16x1xf32>
    %cst_10 = arith.constant 3.200000e+01 : f32
    %17 = vector.broadcast %cst_10 : f32 to vector<16x1xf32>
    %18 = arith.divf %16, %17 : vector<16x1xf32>
    %cst_11 = arith.constant 9.99999996E-13 : f32
    %19 = vector.broadcast %cst_11 : f32 to vector<16x1xf32>
    %20 = arith.addf %18, %19 : vector<16x1xf32>
    %21 = math.rsqrt %20 : vector<16x1xf32>
    %22 = vector.broadcast %21 : vector<16x1xf32> to vector<16x32xf32>
    %23 = arith.mulf %13, %22 : vector<16x32xf32>
    %c0_12 = arith.constant 0 : index
    %c0_13 = arith.constant 0 : index
    %24 = vector.load %arg5[%c0_12, %c0_13] : memref<1x32xf32, #tpu.memory_space<vmem>>, vector<1x32xf32>
    %25 = vector.broadcast %24 : vector<1x32xf32> to vector<16x32xf32>
    %26 = arith.mulf %23, %25 : vector<16x32xf32>
    %c0_14 = arith.constant 0 : index
    %c0_15 = arith.constant 0 : index
    %27 = vector.load %arg6[%c0_14, %c0_15] : memref<1x32xf32, #tpu.memory_space<vmem>>, vector<1x32xf32>
    %28 = vector.broadcast %27 : vector<1x32xf32> to vector<16x32xf32>
    %29 = arith.addf %26, %28 : vector<16x32xf32>
    %c0_16 = arith.constant 0 : index
    %c0_17 = arith.constant 0 : index
    %30 = vector.load %arg7[%c0_16, %c0_17] : memref<16x32xf32, #tpu.memory_space<vmem>>, vector<16x32xf32>
    tpu.vector_store %arg7[%c0_16, %c0_17], %29 {strides = array<i32>} : memref<16x32xf32, #tpu.memory_space<vmem>>, vector<16x32xf32>,
    return
  }
  func.func @transform_0(%arg0: i32) -> (i32, i32) {
    %c0_i32 = arith.constant 0 : i32
    %c0_i32_0 = arith.constant 0 : i32
    return %arg0, %c0_i32 : i32, i32
  }
  func.func @transform_1(%arg0: i32) -> (i32, i32) {
    %c0_i32 = arith.constant 0 : i32
    %c0_i32_0 = arith.constant 0 : i32
    %c0_i32_1 = arith.constant 0 : i32
    return %c0_i32, %c0_i32_0 : i32, i32
  }
  func.func @transform_2(%arg0: i32) -> (i32, i32) {
    %c0_i32 = arith.constant 0 : i32
    %c0_i32_0 = arith.constant 0 : i32
    %c0_i32_1 = arith.constant 0 : i32
    return %c0_i32, %c0_i32_0 : i32, i32
  }
  func.func @transform_3(%arg0: i32) -> (i32, i32) {
    %c0_i32 = arith.constant 0 : i32
    %c0_i32_0 = arith.constant 0 : i32
    return %arg0, %c0_i32 : i32, i32
  }
  func.func @transform_4(%arg0: i32) -> (i32, i32) {
    %c0_i32 = arith.constant 0 : i32
    %c0_i32_0 = arith.constant 0 : i32
    %c0_i32_1 = arith.constant 0 : i32
    return %c0_i32, %c0_i32_0 : i32, i32
  }
  func.func @transform_5(%arg0: i32) -> (i32, i32) {
    %c0_i32 = arith.constant 0 : i32
    %c0_i32_0 = arith.constant 0 : i32
    %c0_i32_1 = arith.constant 0 : i32
    return %c0_i32, %c0_i32_0 : i32, i32
  }
  func.func @transform_6(%arg0: i32) -> (i32, i32) {
    %c0_i32 = arith.constant 0 : i32
    %c0_i32_0 = arith.constant 0 : i32
    return %arg0, %c0_i32 : i32, i32
  }
}

</mosaic_0001>

<llo_original>
// kernel: bert_encoder_forward.10
$region0: #{bert_encoder_forward.10}
  #allocation0 [shape = 'u32[]', space=smem, size = 0x4, offset = 0x4, fixed_abs, tag = 'smem constant byte address 0x4 - core index']
  #allocation1 [shape = 'u32[72,128]{1,0:T(1,128)}', space=vmem, size = 0x9000, scoped, tag = 'internal scratch']
  %s0 = inlined_call_operand.vmem [shape: f32[16,32], index: 0, kind: input, shape index: {}]
  %s1 = inlined_call_operand.hbm [shape: f32[32,96], index: 1, kind: input, shape index: {}]
  %s2 = inlined_call_operand.vmem [shape: f32[1,96], index: 2, kind: input, shape index: {}]
  %s3 = inlined_call_operand.vmem [shape: f32[16,96], index: 3, kind: output, shape index: {}]
  %s4 = sld [smem:[#allocation0]]
  $region26: #{bert_encoder_forward.10} parent=0
    _
  %s6 = ssub.s32 1, %s4
  %s7 = scalar_select 0, %s6, %s4
  $region1: #{bert_encoder_forward.10} parent=0
    #allocation2 [shape = 'u8[16384]{0}', space=vmem, size = 0x4000, scoped, tag = 'input window, operand 1, single buffered']
    #allocation3 [shape = 's32[1]{0}', space=sflag, size = 0x4, scoped, tag = 'scoped memory for bert_encoder_forward.10']
    %8 = vsyncpa [#allocation3], 0
    // Predicated region
    $region2: #{bert_encoder_forward.10} parent=1 // pred_check
      _
    $region3: #{bert_encoder_forward.10} parent=1 // pred_check_branch
      %10 = sbr.rel (0) target = $region5
    $region4: #{bert_encoder_forward.10} parent=1 // pred_region
      _
    $region5: #{bert_encoder_forward.10} parent=1 // pred_fallthru
      _
    // Predicated region
    $region6: #{bert_encoder_forward.10} parent=1 // pred_check
      _
    $region7: #{bert_encoder_forward.10} parent=1 // pred_check_branch
      %12 = sbr.rel (0) target = $region9
    $region8: #{bert_encoder_forward.10} parent=1 // pred_region
      %14 = vsyncadd [#allocation3], 0
      %s15 = sshll.u32 %s1, 4
      %s16 = int_to_ptr.hbm [resolvable:$true] %s15
      %s17 = sshll.u32 [#allocation2], 4
      %s18 = int_to_ptr.vmem [resolvable:$true] %s17
      %23 = dma.hbm_to_vmem [thread:$0]  %s16, 512, %s18, [#allocation3], 128, 128, 8
    $region9: #{bert_encoder_forward.10} parent=1 // pred_fallthru
      _
    // Predicated region
    $region10: #{bert_encoder_forward.10} parent=1 // pred_check
      _
    $region11: #{bert_encoder_forward.10} parent=1 // pred_check_branch
      %25 = sbr.rel (0) target = $region13
    $region12: #{bert_encoder_forward.10} parent=1 // pred_region
      _
    $region13: #{bert_encoder_forward.10} parent=1 // pred_fallthru
      _
    // Predicated region
    $region14: #{bert_encoder_forward.10} parent=1 // pred_check
      _
    $region15: #{bert_encoder_forward.10} parent=1 // pred_check_branch
      %27 = sbr.rel (0) target = $region17
    $region16: #{bert_encoder_forward.10} parent=1 // pred_region
      %29 = dma.done [#allocation3], 512
    $region17: #{bert_encoder_forward.10} parent=1 // pred_fallthru
      _
    %v30 = vld [vmem:[%s0] sm:$0xff]
    %v31 = vld [vmem:[%s0 + $0x8] sm:$0xff]
    %v32 = vld [vmem:[#allocation2] sm:$0xff]
    %v33 = vld [vmem:[#allocation2 + $0x8] sm:$0xff]
    %v34 = vld [vmem:[#allocation2 + $0x10] sm:$0xff]
    %v35 = vld [vmem:[#allocation2 + $0x18] sm:$0xff]
    %v36 = vld [vmem:[%s2] sm:$0x1]
    %v38 = vperm.slane %v36, 0
    %vm40 = vcmask 261120
    %v42 = vsel %vm40, %v30, 0
    %v45 = vsel %vm40, %v31, 0
    %47 = vmatpush.msra.mxu0 0.0
    %48 = vmatpush.msra.mxu0 0.0
    %49 = vmatpush.msra.mxu0 0.0
    %50 = vmatpush.msra.mxu0 0.0
    %51 = vmatpush.msra.mxu0 0.0
    %52 = vmatpush.msra.mxu0 0.0
    %53 = vmatpush.msra.mxu0 0.0
    %54 = vmatpush.msra.mxu0 0.0
    %55 = vmatpush.msra.mxu0 0.0
    %56 = vmatpush.msra.mxu0 0.0
    %57 = vmatpush.msra.mxu0 0.0
    %58 = vmatpush.msra.mxu0 0.0
    %59 = vmatpush.msra.mxu0 %v35
    %60 = vmatpush.msra.mxu0 %v34
    %61 = vmatpush.msra.mxu0 %v33
    %62 = vmatpush.msra.mxu0 %v32
    %63 = vmatmul.f32.gmra.mxu0 %v42
    %v64 = vpop.f32.mrf.mxu0
    %v65 = vadd.f32 %v38, %v64
    %66 = vmatmul.f32.gmra.mxu0 %v45
    %v67 = vpop.f32.mrf.mxu0
    %v68 = vadd.f32 %v38, %v67
    %69 = vdwg.mxu0
    %vm70 = vcmask 785408
    %71 = vst.msk [vmem:[%s3] sm:$0xff] %vm70, %v65
    %72 = vst.msk [vmem:[%s3 + $0x8] sm:$0xff] %vm70, %v68
    // Predicated region
    $region18: #{bert_encoder_forward.10} parent=1 // pred_check
      _
    $region19: #{bert_encoder_forward.10} parent=1 // pred_check_branch
      %74 = sbr.rel (0) target = $region21
    $region20: #{bert_encoder_forward.10} parent=1 // pred_region
      _
    $region21: #{bert_encoder_forward.10} parent=1 // pred_fallthru
      _
    // Predicated region
    $region22: #{bert_encoder_forward.10} parent=1 // pred_check
      _
    $region23: #{bert_encoder_forward.10} parent=1 // pred_check_branch
      %76 = sbr.rel (0) target = $region25
    $region24: #{bert_encoder_forward.10} parent=1 // pred_region
      _
    $region25: #{bert_encoder_forward.10} parent=1 // pred_fallthru
      _
    %77 = vsyncpa [#allocation3], 1

// kernel: bert_encoder_forward.11
$region0: #{bert_encoder_forward.11}
  #allocation0 [shape = 'u32[]', space=smem, size = 0x4, offset = 0x4, fixed_abs, tag = 'smem constant byte address 0x4 - core index']
  #allocation1 [shape = 'u32[72,128]{1,0:T(1,128)}', space=vmem, size = 0x9000, scoped, tag = 'internal scratch']
  %s0 = inlined_call_operand.vmem [shape: f32[2,8,32], index: 0, kind: input, shape index: {}]
  %s1 = inlined_call_operand.vmem [shape: f32[2,8,32], index: 1, kind: input, shape index: {}]
  %s2 = inlined_call_operand.vmem [shape: f32[2,8,32], index: 2, kind: input, shape index: {}]
  %s3 = inlined_call_operand.vmem [shape: f32[2,1,8], index: 3, kind: input, shape index: {}]
  %s4 = inlined_call_operand.vmem [shape: f32[2,8,32], index: 4, kind: output, shape index: {}]
  %s5 = sld [smem:[#allocation0]]
  $region49: #{bert_encoder_forward.11} parent=0
    _
  %s7 = ssub.s32 1, %s5
  %s8 = scalar_select 0, %s7, %s5
  loop: start=0, step=1, limit=4
  $region2: #{bert_encoder_forward.11} parent=0 // loop_pre_header
    _
  $region3: #{bert_encoder_forward.11} parent=0 // loop_header
    %s10 = sphi 0, %s14
    %p11 = scmp.ge.s32.totalorder %s10, 4
    %s17 = sphi 0, %s29
    %s18 = sphi 0, %s25
    %s19 = sphi 0, %s17
    %s20 = sphi 0, %s18
    %s21 = sphi 0, %s19
    %s22 = sphi 0, %s20
    %s34 = sphi 0, %s36
    %s37 = sphi 0, %s34
    %s38 = sphi 0, %s37
    %s54 = sphi 0, %s38
    %s62 = sphi 0, %s64
    %s65 = sphi 0, %s62
    %s66 = sphi 0, %s65
    %s82 = sphi 0, %s66
    %s90 = sphi 0, %s92
    %s93 = sphi 0, %s90
    %s94 = sphi 0, %s93
    %s110 = sphi 0, %s94
    %s116 = sphi 0, %s118
    %s119 = sphi 0, %s116
    %s120 = sphi 0, %s119
    %s136 = sphi 0, %s120
    %s144 = sphi 0, %s146
    %s147 = sphi 0, %s144
    %s148 = sphi 0, %s147
    %s164 = sphi 0, %s148
  $region4: #{bert_encoder_forward.11} parent=0 // loop_header_branch
    %13 = sbr.rel (%p11) target = $region8
  $region5: #{bert_encoder_forward.11} parent=0 // loop_body
    %s15 = ssub.s32 %s10, 1
    %s16 = ssub.s32 %s10, 2
    %s23 = sadd.s32 1, %s18
    %p24 = scmp.ge.s32.totalorder %s23, 1
    %s25 = scalar_select %p24, 0, %s23
    %s26 = sadd.s32 1, %s17
    %s27 = scalar_select %p24, %s26, %s17
    %p28 = scmp.ge.s32.totalorder %s27, 2
    %s29 = scalar_select %p28, 0, %s27
    %s30 = ssub.s32 %s17, %s29
    %s31 = ssub.s32 %s18, %s25
    %s32 = sor.u32 %s30, %s31
    %p33 = scmp.eq.s32.totalorder %s32, 0
    %s35 = sadd.s32 %s34, 1
    %s36 = scalar_select %p33, %s34, %s35
    %p39 = pneg %p33
    %p40 = scmp.eq.s32.totalorder %s10, 1
    %p41 = por %p39, %p40
    %p42 = scmp.ne.s32.totalorder %s34, %s37
    %p43 = scmp.eq.s32.totalorder %s10, 0
    %p44 = por %p42, %p43
    %p45 = scmp.ne.s32.totalorder %s34, %s37
    %p46 = scmp.eq.s32.totalorder %s15, 1
    %p47 = por %p45, %p46
    %p48 = scmp.ne.s32.totalorder %s37, %s38
    %p49 = scmp.eq.s32.totalorder %s15, 0
    %p50 = por %p48, %p49
    %p51 = scmp.ne.s32.totalorder %s37, %s38
    %p52 = scmp.eq.s32.totalorder %s16, 1
    %p53 = por %p51, %p52
    %p55 = scmp.ne.s32.totalorder %s38, %s54
    %p56 = scmp.eq.s32.totalorder %s16, 0
    %p57 = por %p55, %p56
    %s58 = ssub.s32 %s17, %s29
    %s59 = ssub.s32 %s18, %s25
    %s60 = sor.u32 %s58, %s59
    %p61 = scmp.eq.s32.totalorder %s60, 0
    %s63 = sadd.s32 %s62, 1
    %s64 = scalar_select %p61, %s62, %s63
    %p67 = pneg %p61
    %p68 = scmp.eq.s32.totalorder %s10, 1
    %p69 = por %p67, %p68
    %p70 = scmp.ne.s32.totalorder %s62, %s65
    %p71 = scmp.eq.s32.totalorder %s10, 0
    %p72 = por %p70, %p71
    %p73 = scmp.ne.s32.totalorder %s62, %s65
    %p74 = scmp.eq.s32.totalorder %s15, 1
    %p75 = por %p73, %p74
    %p76 = scmp.ne.s32.totalorder %s65, %s66
    %p77 = scmp.eq.s32.totalorder %s15, 0
    %p78 = por %p76, %p77
    %p79 = scmp.ne.s32.totalorder %s65, %s66
    %p80 = scmp.eq.s32.totalorder %s16, 1
    %p81 = por %p79, %p80
    %p83 = scmp.ne.s32.totalorder %s66, %s82
    %p84 = scmp.eq.s32.totalorder %s16, 0
    %p85 = por %p83, %p84
    %s86 = ssub.s32 %s17, %s29
    %s87 = ssub.s32 %s18, %s25
    %s88 = sor.u32 %s86, %s87
    %p89 = scmp.eq.s32.totalorder %s88, 0
    %s91 = sadd.s32 %s90, 1
    %s92 = scalar_select %p89, %s90, %s91
    %p95 = pneg %p89
    %p96 = scmp.eq.s32.totalorder %s10, 1
    %p97 = por %p95, %p96
    %p98 = scmp.ne.s32.totalorder %s90, %s93
    %p99 = scmp.eq.s32.totalorder %s10, 0
    %p100 = por %p98, %p99
    %p101 = scmp.ne.s32.totalorder %s90, %s93
    %p102 = scmp.eq.s32.totalorder %s15, 1
    %p103 = por %p101, %p102
    %p104 = scmp.ne.s32.totalorder %s93, %s94
    %p105 = scmp.eq.s32.totalorder %s15, 0
    %p106 = por %p104, %p105
    %p107 = scmp.ne.s32.totalorder %s93, %s94
    %p108 = scmp.eq.s32.totalorder %s16, 1
    %p109 = por %p107, %p108
    %p111 = scmp.ne.s32.totalorder %s94, %s110
    %p112 = scmp.eq.s32.totalorder %s16, 0
    %p113 = por %p111, %p112
    %s114 = ssub.s32 %s17, %s29
    %p115 = scmp.eq.s32.totalorder %s114, 0
    %s117 = sadd.s32 %s116, 1
    %s118 = scalar_select %p115, %s116, %s117
    %p121 = pneg %p115
    %p122 = scmp.eq.s32.totalorder %s10, 1
    %p123 = por %p121, %p122
    %p124 = scmp.ne.s32.totalorder %s116, %s119
    %p125 = scmp.eq.s32.totalorder %s10, 0
    %p126 = por %p124, %p125
    %p127 = scmp.ne.s32.totalorder %s116, %s119
    %p128 = scmp.eq.s32.totalorder %s15, 1
    %p129 = por %p127, %p128
    %p130 = scmp.ne.s32.totalorder %s119, %s120
    %p131 = scmp.eq.s32.totalorder %s15, 0
    %p132 = por %p130, %p131
    %p133 = scmp.ne.s32.totalorder %s119, %s120
    %p134 = scmp.eq.s32.totalorder %s16, 1
    %p135 = por %p133, %p134
    %p137 = scmp.ne.s32.totalorder %s120, %s136
    %p138 = scmp.eq.s32.totalorder %s16, 0
    %p139 = por %p137, %p138
    %s140 = ssub.s32 %s17, %s29
    %s141 = ssub.s32 %s18, %s25
    %s142 = sor.u32 %s140, %s141
    %p143 = scmp.eq.s32.totalorder %s142, 0
    %s145 = sadd.s32 %s144, 1
    %s146 = scalar_select %p143, %s144, %s145
    %p149 = pneg %p143
    %p150 = scmp.eq.s32.totalorder %s10, 1
    %p151 = por %p149, %p150
    %p152 = scmp.ne.s32.totalorder %s144, %s147
    %p153 = scmp.eq.s32.totalorder %s10, 0
    %p154 = por %p152, %p153
    %p155 = scmp.ne.s32.totalorder %s144, %s147
    %p156 = scmp.eq.s32.totalorder %s15, 1
    %p157 = por %p155, %p156
    %p158 = scmp.ne.s32.totalorder %s147, %s148
    %p159 = scmp.eq.s32.totalorder %s15, 0
    %p160 = por %p158, %p159
    %p161 = scmp.ne.s32.totalorder %s147, %s148
    %p162 = scmp.eq.s32.totalorder %s16, 1
    %p163 = por %p161, %p162
    %p165 = scmp.ne.s32.totalorder %s148, %s164
    %p166 = scmp.eq.s32.totalorder %s16, 0
    %p167 = por %p165, %p166
    %p168 = scmp.le.s32.totalorder 1, %s10
    %p169 = scmp.lt.s32.totalorder %s10, 3
    %p170 = pnand %p168, %p169
    %p171 = pneg %p170
    // Predicated region
    $region9: #{bert_encoder_forward.11} parent=5 // pred_check
      _
    $region10: #{bert_encoder_forward.11} parent=5 // pred_check_branch
      %173 = sbr.rel (%p170) target = $region12
    $region11: #{bert_encoder_forward.11} parent=5 // pred_region
      %s174 = ssub.s32 %s10, 1
    $region12: #{bert_encoder_forward.11} parent=5 // pred_fallthru
      _
    %p175 = scmp.lt.s32.totalorder %s10, 2
    // Predicated region
    $region13: #{bert_encoder_forward.11} parent=5 // pred_check
      %p176 = pneg %p175
    $region14: #{bert_encoder_forward.11} parent=5 // pred_check_branch
      %178 = sbr.rel (%p176) target = $region16
    $region15: #{bert_encoder_forward.11} parent=5 // pred_region
      // Predicated region
      $region17: #{bert_encoder_forward.11} parent=15 // pred_check
        %p179 = pneg %p44
      $region18: #{bert_encoder_forward.11} parent=15 // pred_check_branch
        %181 = sbr.rel (%p179) target = $region20
      $region19: #{bert_encoder_forward.11} parent=15 // pred_region
        %p182 = scmp.lt.s32.totalorder %s17, 1
        %s183 = scalar_select %p182, %s17, 1
        %p184 = scmp.lt.s32.totalorder %s18, 0
        %s185 = scalar_select %p184, %s18, 0
        %s186 = sadd.s32 %s185, %s183
        %s187 = smul.addr %s186, 8
        %s188 = scalar_lea.vmem %s0, %s187
      $region20: #{bert_encoder_forward.11} parent=15 // pred_fallthru
        _
      // Predicated region
      $region21: #{bert_encoder_forward.11} parent=15 // pred_check
        %p189 = pneg %p72
      $region22: #{bert_encoder_forward.11} parent=15 // pred_check_branch
        %191 = sbr.rel (%p189) target = $region24
      $region23: #{bert_encoder_forward.11} parent=15 // pred_region
        %p192 = scmp.lt.s32.totalorder %s17, 1
        %s193 = scalar_select %p192, %s17, 1
        %p194 = scmp.lt.s32.totalorder %s18, 0
        %s195 = scalar_select %p194, %s18, 0
        %s196 = sadd.s32 %s195, %s193
        %s197 = smul.addr %s196, 8
        %s198 = scalar_lea.vmem %s1, %s197
      $region24: #{bert_encoder_forward.11} parent=15 // pred_fallthru
        _
      // Predicated region
      $region25: #{bert_encoder_forward.11} parent=15 // pred_check
        %p199 = pneg %p100
      $region26: #{bert_encoder_forward.11} parent=15 // pred_check_branch
        %201 = sbr.rel (%p199) target = $region28
      $region27: #{bert_encoder_forward.11} parent=15 // pred_region
        %p202 = scmp.lt.s32.totalorder %s17, 1
        %s203 = scalar_select %p202, %s17, 1
        %p204 = scmp.lt.s32.totalorder %s18, 0
        %s205 = scalar_select %p204, %s18, 0
        %s206 = sadd.s32 %s205, %s203
        %s207 = smul.addr %s206, 8
        %s208 = scalar_lea.vmem %s2, %s207
      $region28: #{bert_encoder_forward.11} parent=15 // pred_fallthru
        _
      // Predicated region
      $region29: #{bert_encoder_forward.11} parent=15 // pred_check
        %p209 = pneg %p126
      $region30: #{bert_encoder_forward.11} parent=15 // pred_check_branch
        %211 = sbr.rel (%p209) target = $region32
      $region31: #{bert_encoder_forward.11} parent=15 // pred_region
        %p212 = scmp.lt.s32.totalorder %s17, 1
        %s213 = scalar_select %p212, %s17, 1
        %s214 = scalar_lea.vmem %s3, %s213
      $region32: #{bert_encoder_forward.11} parent=15 // pred_fallthru
        _
    $region16: #{bert_encoder_forward.11} parent=5 // pred_fallthru
      _
    %p215 = scmp.le.s32.totalorder 1, %s10
    %p216 = scmp.lt.s32.totalorder %s10, 3
    %p217 = pnand %p215, %p216
    %p218 = pneg %p217
    // Predicated region
    $region33: #{bert_encoder_forward.11} parent=5 // pred_check
      _
    $region34: #{bert_encoder_forward.11} parent=5 // pred_check_branch
      %220 = sbr.rel (%p217) target = $region36
    $region35: #{bert_encoder_forward.11} parent=5 // pred_region
      %s221 = ssub.s32 %s10, 1
      %p222 = scmp.lt.s32.totalorder %s19, 1
      %s223 = scalar_select %p222, %s19, 1
      %p224 = scmp.lt.s32.totalorder %s20, 0
      %s225 = scalar_select %p224, %s20, 0
      %s226 = sadd.s32 %s225, %s223
      %s227 = smul.addr %s226, 8
      %s228 = scalar_lea.vmem %s0, %s227
      %p229 = pneg %p50
      %p230 = pneg %p47
      %p231 = scmp.lt.s32.totalorder %s19, 1
      %s232 = scalar_select %p231, %s19, 1
      %p233 = scmp.lt.s32.totalorder %s20, 0
      %s234 = scalar_select %p233, %s20, 0
      %s235 = sadd.s32 %s234, %s232
      %s236 = smul.addr %s235, 8
      %s237 = scalar_lea.vmem %s1, %s236
      %p238 = pneg %p78
      %p239 = pneg %p75
      %p240 = scmp.lt.s32.totalorder %s19, 1
      %s241 = scalar_select %p240, %s19, 1
      %p242 = scmp.lt.s32.totalorder %s20, 0
      %s243 = scalar_select %p242, %s20, 0
      %s244 = sadd.s32 %s243, %s241
      %s245 = smul.addr %s244, 8
      %s246 = scalar_lea.vmem %s2, %s245
      %p247 = pneg %p106
      %p248 = pneg %p103
      %p249 = scmp.lt.s32.totalorder %s19, 1
      %s250 = scalar_select %p249, %s19, 1
      %s251 = scalar_lea.vmem %s3, %s250
      %p252 = pneg %p132
      %p253 = pneg %p129
      %p254 = pneg %p160
      %p255 = pneg %p157
      %p256 = scmp.lt.s32.totalorder %s19, 1
      %s257 = scalar_select %p256, %s19, 1
      %p258 = scmp.lt.s32.totalorder %s20, 0
      %s259 = scalar_select %p258, %s20, 0
      %s260 = sadd.s32 %s259, %s257
      %s261 = smul.addr %s260, 8
      %s262 = scalar_lea.vmem %s4, %s261
      %p263 = scmp.lt.s32.totalorder %s19, 1
      %s264 = scalar_select %p263, %s19, 1
      %p265 = scmp.lt.s32.totalorder %s20, 0
      %s266 = scalar_select %p265, %s20, 0
      %s267 = sadd.s32 %s266, %s264
      %s268 = smul.addr %s267, 8
      %s269 = scalar_lea.vmem %s0, %s268
      %p270 = scmp.lt.s32.totalorder %s19, 1
      %s271 = scalar_select %p270, %s19, 1
      %p272 = scmp.lt.s32.totalorder %s20, 0
      %s273 = scalar_select %p272, %s20, 0
      %s274 = sadd.s32 %s273, %s271
      %s275 = smul.addr %s274, 8
      %s276 = scalar_lea.vmem %s1, %s275
      %p277 = scmp.lt.s32.totalorder %s19, 1
      %s278 = scalar_select %p277, %s19, 1
      %p279 = scmp.lt.s32.totalorder %s20, 0
      %s280 = scalar_select %p279, %s20, 0
      %s281 = sadd.s32 %s280, %s278
      %s282 = smul.addr %s281, 8
      %s283 = scalar_lea.vmem %s2, %s282
      %p284 = scmp.lt.s32.totalorder %s19, 1
      %s285 = scalar_select %p284, %s19, 1
      %s286 = scalar_lea.vmem %s3, %s285
      %p287 = scmp.lt.s32.totalorder %s19, 1
      %s288 = scalar_select %p287, %s19, 1
      %p289 = scmp.lt.s32.totalorder %s20, 0
      %s290 = scalar_select %p289, %s20, 0
      %s291 = sadd.s32 %s290, %s288
      %s292 = smul.addr %s291, 8
      %s293 = scalar_lea.vmem %s4, %s292
      %v294 = vld [vmem:[%s286] sm:$0x1]
      %v295 = vld [vmem:[%s269] sm:$0xff]
      %v296 = vld [vmem:[%s276] sm:$0xff]
      %v297 = vld [vmem:[%s283] sm:$0xff]
      %vm298 = vcmask 64512
      %v300 = vsel %vm298, %v295, 0
      %v303 = vsel %vm298, %v296, 0
      %305 = vmatpush.xpose.msra.mxu0 0.0
      %306 = vmatpush.xpose.msra.mxu0 0.0
      %307 = vmatpush.xpose.msra.mxu0 0.0
      %308 = vmatpush.xpose.msra.mxu0 0.0
      %309 = vmatpush.xpose.msra.mxu0 0.0
      %310 = vmatpush.xpose.msra.mxu0 0.0
      %311 = vmatpush.xpose.msra.mxu0 0.0
      %312 = vmatpush.xpose.msra.mxu0 0.0
      %313 = vmatpush.xpose.msra.mxu0 0.0
      %314 = vmatpush.xpose.msra.mxu0 0.0
      %315 = vmatpush.xpose.msra.mxu0 0.0
      %316 = vmatpush.xpose.msra.mxu0 0.0
      %317 = vmatpush.xpose.msra.mxu0 0.0
      %318 = vmatpush.xpose.msra.mxu0 0.0
      %319 = vmatpush.xpose.msra.mxu0 0.0
      %320 = vmatpush.xpose.msra.mxu0 %v303
      %321 = vmatmul.f32.gmra.mxu0 %v300
      %v322 = vpop.f32.mrf.mxu0
      %v323 = vadd.f32 0.0, %v322
      %324 = vdwg.mxu0
      %v325 = vmul.f32 %v323, 0.35355338
      %v327 = vperm.slane %v294, 0
      %v329 = vadd.f32 %v325, %v327
      %v330 = vsel %vm298, %v329, -inf
      %331 = vmax.xlane.f32.xlu0 %v330
      %v332 = vpop.xlane.xlu0 %331
      %v333 = vsub.f32 %v329, %v332
      %v334 = vmul.f32 %v333, 1.442695
      %v335 = vpow.pop %v334
      %v336 = vsel %vm298, %v335, 0.0
      %337 = vadd.xlane.f32.xlu0 %v336
      %v338 = vpop.xlane.xlu0 %337
      %v339 = vrcp.pop %v338
      %v340 = vmul.f32 %v338, %v339
      %v341 = vsub.f32 1.0, %v340
      %v342 = vmul.f32 %v339, %v341
      %v343 = vadd.f32 %v339, %v342
      %vm344 = vweird.f32 %v338
      %vm345 = vweird.f32 %v339
      %vm346 = vmor %vm344, %vm345
      %v347 = vsel %vm346, %v339, %v343
      %v348 = vand.u32 2147483647, %v338
      %vm349 = vcmp.eq.f32.partialorder %v348, 8.507059e+37
      %v350 = vand.u32 %v338, 2147483648
      %v351 = vor.u32 1.1754944e-38, %v350
      %v352 = vsel %vm349, %v351, %v347
      %v353 = vmul.f32 %v335, %v352
      %v355 = vsel %vm298, %v353, 0
      %357 = vmatpush.msra.mxu0 0.0
      %358 = vmatpush.msra.mxu0 0.0
      %359 = vmatpush.msra.mxu0 0.0
      %360 = vmatpush.msra.mxu0 0.0
      %361 = vmatpush.msra.mxu0 0.0
      %362 = vmatpush.msra.mxu0 0.0
      %363 = vmatpush.msra.mxu0 0.0
      %364 = vmatpush.msra.mxu0 0.0
      %365 = vmatpush.msra.mxu0 0.0
      %366 = vmatpush.msra.mxu0 0.0
      %367 = vmatpush.msra.mxu0 0.0
      %368 = vmatpush.msra.mxu0 0.0
      %369 = vmatpush.msra.mxu0 0.0
      %370 = vmatpush.msra.mxu0 0.0
      %371 = vmatpush.msra.mxu0 0.0
      %372 = vmatpush.msra.mxu0 %v297
      %373 = vmatmul.f32.gmra.mxu0 %v355
      %v374 = vpop.f32.mrf.mxu0
      %v375 = vadd.f32 0.0, %v374
      %376 = vdwg.mxu0
      %377 = vrot.lane.b32.xlu0 %v295, 120
      %v378 = vpop.permute.xlu0 %377
      %379 = vrot.lane.b32.xlu0 %v296, 120
      %v380 = vpop.permute.xlu0 %379
      %v381 = vsel %vm298, %v378, 0
      %v383 = vsel %vm298, %v380, 0
      %385 = vmatpush.xpose.msra.mxu0 0.0
      %386 = vmatpush.xpose.msra.mxu0 0.0
      %387 = vmatpush.xpose.msra.mxu0 0.0
      %388 = vmatpush.xpose.msra.mxu0 0.0
      %389 = vmatpush.xpose.msra.mxu0 0.0
      %390 = vmatpush.xpose.msra.mxu0 0.0
      %391 = vmatpush.xpose.msra.mxu0 0.0
      %392 = vmatpush.xpose.msra.mxu0 0.0
      %393 = vmatpush.xpose.msra.mxu0 0.0
      %394 = vmatpush.xpose.msra.mxu0 0.0
      %395 = vmatpush.xpose.msra.mxu0 0.0
      %396 = vmatpush.xpose.msra.mxu0 0.0
      %397 = vmatpush.xpose.msra.mxu0 0.0
      %398 = vmatpush.xpose.msra.mxu0 0.0
      %399 = vmatpush.xpose.msra.mxu0 0.0
      %400 = vmatpush.xpose.msra.mxu0 %v383
      %401 = vmatmul.f32.gmra.mxu0 %v381
      %v402 = vpop.f32.mrf.mxu0
      %v403 = vadd.f32 0.0, %v402
      %404 = vdwg.mxu0
      %v405 = vmul.f32 %v403, 0.35355338
      %v406 = vadd.f32 %v405, %v327
      %v407 = vsel %vm298, %v406, -inf
      %408 = vmax.xlane.f32.xlu0 %v407
      %v409 = vpop.xlane.xlu0 %408
      %v410 = vsub.f32 %v406, %v409
      %v411 = vmul.f32 %v410, 1.442695
      %v412 = vpow.pop %v411
      %v413 = vsel %vm298, %v412, 0.0
      %414 = vadd.xlane.f32.xlu0 %v413
      %v415 = vpop.xlane.xlu0 %414
      %v416 = vrcp.pop %v415
      %v417 = vmul.f32 %v415, %v416
      %v418 = vsub.f32 1.0, %v417
      %v419 = vmul.f32 %v416, %v418
      %v420 = vadd.f32 %v416, %v419
      %vm421 = vweird.f32 %v415
      %vm422 = vweird.f32 %v416
      %vm423 = vmor %vm421, %vm422
      %v424 = vsel %vm423, %v416, %v420
      %v425 = vand.u32 2147483647, %v415
      %vm426 = vcmp.eq.f32.partialorder %v425, 8.507059e+37
      %v427 = vand.u32 %v415, 2147483648
      %v428 = vor.u32 1.1754944e-38, %v427
      %v429 = vsel %vm426, %v428, %v424
      %v430 = vmul.f32 %v412, %v429
      %432 = vrot.lane.b32.xlu0 %v297, 120
      %v433 = vpop.permute.xlu0 %432
      %v436 = vsel %vm298, %v430, 0
      %438 = vmatpush.msra.mxu0 0.0
      %439 = vmatpush.msra.mxu0 0.0
      %440 = vmatpush.msra.mxu0 0.0
      %441 = vmatpush.msra.mxu0 0.0
      %442 = vmatpush.msra.mxu0 0.0
      %443 = vmatpush.msra.mxu0 0.0
      %444 = vmatpush.msra.mxu0 0.0
      %445 = vmatpush.msra.mxu0 0.0
      %446 = vmatpush.msra.mxu0 0.0
      %447 = vmatpush.msra.mxu0 0.0
      %448 = vmatpush.msra.mxu0 0.0
      %449 = vmatpush.msra.mxu0 0.0
      %450 = vmatpush.msra.mxu0 0.0
      %451 = vmatpush.msra.mxu0 0.0
      %452 = vmatpush.msra.mxu0 0.0
      %453 = vmatpush.msra.mxu0 %v433
      %454 = vmatmul.f32.gmra.mxu0 %v436
      %v455 = vpop.f32.mrf.mxu0
      %v456 = vadd.f32 0.0, %v455
      %457 = vdwg.mxu0
      %458 = vrot.lane.b32.xlu0 %v295, 112
      %v459 = vpop.permute.xlu0 %458
      %460 = vrot.lane.b32.xlu0 %v296, 112
      %v461 = vpop.permute.xlu0 %460
      %v462 = vsel %vm298, %v459, 0
      %v464 = vsel %vm298, %v461, 0
      %466 = vmatpush.xpose.msra.mxu0 0.0
      %467 = vmatpush.xpose.msra.mxu0 0.0
      %468 = vmatpush.xpose.msra.mxu0 0.0
      %469 = vmatpush.xpose.msra.mxu0 0.0
      %470 = vmatpush.xpose.msra.mxu0 0.0
      %471 = vmatpush.xpose.msra.mxu0 0.0
      %472 = vmatpush.xpose.msra.mxu0 0.0
      %473 = vmatpush.xpose.msra.mxu0 0.0
      %474 = vmatpush.xpose.msra.mxu0 0.0
      %475 = vmatpush.xpose.msra.mxu0 0.0
      %476 = vmatpush.xpose.msra.mxu0 0.0
      %477 = vmatpush.xpose.msra.mxu0 0.0
      %478 = vmatpush.xpose.msra.mxu0 0.0
      %479 = vmatpush.xpose.msra.mxu0 0.0
      %480 = vmatpush.xpose.msra.mxu0 0.0
      %481 = vmatpush.xpose.msra.mxu0 %v464
      %482 = vmatmul.f32.gmra.mxu0 %v462
      %v483 = vpop.f32.mrf.mxu0
      %v484 = vadd.f32 0.0, %v483
      %485 = vdwg.mxu0
      %v486 = vmul.f32 %v484, 0.35355338
      %v487 = vadd.f32 %v486, %v327
      %v488 = vsel %vm298, %v487, -inf
      %489 = vmax.xlane.f32.xlu0 %v488
      %v490 = vpop.xlane.xlu0 %489
      %v491 = vsub.f32 %v487, %v490
      %v492 = vmul.f32 %v491, 1.442695
      %v493 = vpow.pop %v492
      %v494 = vsel %vm298, %v493, 0.0
      %495 = vadd.xlane.f32.xlu0 %v494
      %v496 = vpop.xlane.xlu0 %495
      %v497 = vrcp.pop %v496
      %v498 = vmul.f32 %v496, %v497
      %v499 = vsub.f32 1.0, %v498
      %v500 = vmul.f32 %v497, %v499
      %v501 = vadd.f32 %v497, %v500
      %vm502 = vweird.f32 %v496
      %vm503 = vweird.f32 %v497
      %vm504 = vmor %vm502, %vm503
      %v505 = vsel %vm504, %v497, %v501
      %v506 = vand.u32 2147483647, %v496
      %vm507 = vcmp.eq.f32.partialorder %v506, 8.507059e+37
      %v508 = vand.u32 %v496, 2147483648
      %v509 = vor.u32 1.1754944e-38, %v508
      %v510 = vsel %vm507, %v509, %v505
      %v511 = vmul.f32 %v493, %v510
      %512 = vrot.lane.b32.xlu0 %v297, 112
      %v513 = vpop.permute.xlu0 %512
      %v516 = vsel %vm298, %v511, 0
      %518 = vmatpush.msra.mxu0 0.0
      %519 = vmatpush.msra.mxu0 0.0
      %520 = vmatpush.msra.mxu0 0.0
      %521 = vmatpush.msra.mxu0 0.0
      %522 = vmatpush.msra.mxu0 0.0
      %523 = vmatpush.msra.mxu0 0.0
      %524 = vmatpush.msra.mxu0 0.0
      %525 = vmatpush.msra.mxu0 0.0
      %526 = vmatpush.msra.mxu0 0.0
      %527 = vmatpush.msra.mxu0 0.0
      %528 = vmatpush.msra.mxu0 0.0
      %529 = vmatpush.msra.mxu0 0.0
      %530 = vmatpush.msra.mxu0 0.0
      %531 = vmatpush.msra.mxu0 0.0
      %532 = vmatpush.msra.mxu0 0.0
      %533 = vmatpush.msra.mxu0 %v513
      %534 = vmatmul.f32.gmra.mxu0 %v516
      %v535 = vpop.f32.mrf.mxu0
      %v536 = vadd.f32 0.0, %v535
      %537 = vdwg.mxu0
      %538 = vrot.lane.b32.xlu0 %v295, 104
      %v539 = vpop.permute.xlu0 %538
      %540 = vrot.lane.b32.xlu0 %v296, 104
      %v541 = vpop.permute.xlu0 %540
      %v542 = vsel %vm298, %v539, 0
      %v544 = vsel %vm298, %v541, 0
      %546 = vmatpush.xpose.msra.mxu0 0.0
      %547 = vmatpush.xpose.msra.mxu0 0.0
      %548 = vmatpush.xpose.msra.mxu0 0.0
      %549 = vmatpush.xpose.msra.mxu0 0.0
      %550 = vmatpush.xpose.msra.mxu0 0.0
      %551 = vmatpush.xpose.msra.mxu0 0.0
      %552 = vmatpush.xpose.msra.mxu0 0.0
      %553 = vmatpush.xpose.msra.mxu0 0.0
      %554 = vmatpush.xpose.msra.mxu0 0.0
      %555 = vmatpush.xpose.msra.mxu0 0.0
      %556 = vmatpush.xpose.msra.mxu0 0.0
      %557 = vmatpush.xpose.msra.mxu0 0.0
      %558 = vmatpush.xpose.msra.mxu0 0.0
      %559 = vmatpush.xpose.msra.mxu0 0.0
      %560 = vmatpush.xpose.msra.mxu0 0.0
      %561 = vmatpush.xpose.msra.mxu0 %v544
      %562 = vmatmul.f32.gmra.mxu0 %v542
      %v563 = vpop.f32.mrf.mxu0
      %v564 = vadd.f32 0.0, %v563
      %565 = vdwg.mxu0
      %v566 = vmul.f32 %v564, 0.35355338
      %v567 = vadd.f32 %v566, %v327
      %v568 = vsel %vm298, %v567, -inf
      %569 = vmax.xlane.f32.xlu0 %v568
      %v570 = vpop.xlane.xlu0 %569
      %v571 = vsub.f32 %v567, %v570
      %v572 = vmul.f32 %v571, 1.442695
      %v573 = vpow.pop %v572
      %v574 = vsel %vm298, %v573, 0.0
      %575 = vadd.xlane.f32.xlu0 %v574
      %v576 = vpop.xlane.xlu0 %575
      %v577 = vrcp.pop %v576
      %v578 = vmul.f32 %v576, %v577
      %v579 = vsub.f32 1.0, %v578
      %v580 = vmul.f32 %v577, %v579
      %v581 = vadd.f32 %v577, %v580
      %vm582 = vweird.f32 %v576
      %vm583 = vweird.f32 %v577
      %vm584 = vmor %vm582, %vm583
      %v585 = vsel %vm584, %v577, %v581
      %v586 = vand.u32 2147483647, %v576
      %vm587 = vcmp.eq.f32.partialorder %v586, 8.507059e+37
      %v588 = vand.u32 %v576, 2147483648
      %v589 = vor.u32 1.1754944e-38, %v588
      %v590 = vsel %vm587, %v589, %v585
      %v591 = vmul.f32 %v573, %v590
      %592 = vrot.lane.b32.xlu0 %v297, 104
      %v593 = vpop.permute.xlu0 %592
      %v596 = vsel %vm298, %v591, 0
      %598 = vmatpush.msra.mxu0 0.0
      %599 = vmatpush.msra.mxu0 0.0
      %600 = vmatpush.msra.mxu0 0.0
      %601 = vmatpush.msra.mxu0 0.0
      %602 = vmatpush.msra.mxu0 0.0
      %603 = vmatpush.msra.mxu0 0.0
      %604 = vmatpush.msra.mxu0 0.0
      %605 = vmatpush.msra.mxu0 0.0
      %606 = vmatpush.msra.mxu0 0.0
      %607 = vmatpush.msra.mxu0 0.0
      %608 = vmatpush.msra.mxu0 0.0
      %609 = vmatpush.msra.mxu0 0.0
      %610 = vmatpush.msra.mxu0 0.0
      %611 = vmatpush.msra.mxu0 0.0
      %612 = vmatpush.msra.mxu0 0.0
      %613 = vmatpush.msra.mxu0 %v593
      %614 = vmatmul.f32.gmra.mxu0 %v596
      %v615 = vpop.f32.mrf.mxu0
      %v616 = vadd.f32 0.0, %v615
      %617 = vdwg.mxu0
      %619 = vrot.lane.b32.xlu0 %v456, 8
      %v620 = vpop.permute.xlu0 %619
      %623 = vrot.lane.b32.xlu0 %v536, 16
      %v624 = vpop.permute.xlu0 %623
      %627 = vrot.lane.b32.xlu0 %v616, 24
      %v628 = vpop.permute.xlu0 %627
      %v630 = vsel %vm298, %v375, %v620
      %vm631 = vcmask 130048
      %v632 = vsel %vm631, %v630, %v624
      %vm633 = vcmask 195584
      %v634 = vsel %vm633, %v632, %v628
      %vm635 = vcmask 261120
      %636 = vst.msk [vmem:[%s293] sm:$0xff] %vm635, %v634
      %p637 = scmp.lt.s32.totalorder %s19, 1
      %s638 = scalar_select %p637, %s19, 1
      %p639 = scmp.lt.s32.totalorder %s20, 0
      %s640 = scalar_select %p639, %s20, 0
      %s641 = sadd.s32 %s640, %s638
      %s642 = smul.addr %s641, 8
      %s643 = scalar_lea.vmem %s4, %s642
      // Predicated region
      $region37: #{bert_encoder_forward.11} parent=35 // pred_check
        %p644 = pneg %p157
      $region38: #{bert_encoder_forward.11} parent=35 // pred_check_branch
        %646 = sbr.rel (%p644) target = $region40
      $region39: #{bert_encoder_forward.11} parent=35 // pred_region
        _
      $region40: #{bert_encoder_forward.11} parent=35 // pred_fallthru
        _
    $region36: #{bert_encoder_forward.11} parent=5 // pred_fallthru
      _
    %p647 = scmp.le.s32.totalorder 2, %s10
    // Predicated region
    $region41: #{bert_encoder_forward.11} parent=5 // pred_check
      %p648 = pneg %p647
    $region42: #{bert_encoder_forward.11} parent=5 // pred_check_branch
      %650 = sbr.rel (%p648) target = $region44
    $region43: #{bert_encoder_forward.11} parent=5 // pred_region
      %s651 = ssub.s32 %s10, 2
      // Predicated region
      $region45: #{bert_encoder_forward.11} parent=43 // pred_check
        %p652 = pneg %p163
      $region46: #{bert_encoder_forward.11} parent=43 // pred_check_branch
        %654 = sbr.rel (%p652) target = $region48
      $region47: #{bert_encoder_forward.11} parent=43 // pred_region
        %p655 = scmp.lt.s32.totalorder %s21, 1
        %s656 = scalar_select %p655, %s21, 1
        %p657 = scmp.lt.s32.totalorder %s22, 0
        %s658 = scalar_select %p657, %s22, 0
        %s659 = sadd.s32 %s658, %s656
        %s660 = smul.addr %s659, 8
        %s661 = scalar_lea.vmem %s4, %s660
      $region48: #{bert_encoder_forward.11} parent=43 // pred_fallthru
        _
    $region44: #{bert_encoder_forward.11} parent=5 // pred_fallthru
      _
  $region6: #{bert_encoder_forward.11} parent=0 // loop_footer
    %s14 = sadd.s32 1, %s10
  $region7: #{bert_encoder_forward.11} parent=0 // loop_footer_branch
    %9 = sbr.rel target = $region3
  $region8: #{bert_encoder_forward.11} parent=0 // loop_exit
    _

// kernel: bert_encoder_forward.12
$region0: #{bert_encoder_forward.12}
  #allocation0 [shape = 'u32[]', space=smem, size = 0x4, offset = 0x4, fixed_abs, tag = 'smem constant byte address 0x4 - core index']
  #allocation1 [shape = 'u32[72,128]{1,0:T(1,128)}', space=vmem, size = 0x9000, scoped, tag = 'internal scratch']
  %s0 = inlined_call_operand.vmem [shape: f32[16,32], index: 0, kind: input, shape index: {}]
  %s1 = inlined_call_operand.vmem [shape: f32[32,32], index: 1, kind: input, shape index: {}]
  %s2 = inlined_call_operand.vmem [shape: f32[1,32], index: 2, kind: input, shape index: {}]
  %s3 = inlined_call_operand.vmem [shape: f32[16,32], index: 3, kind: input, shape index: {}]
  %s4 = inlined_call_operand.vmem [shape: f32[1,32], index: 4, kind: input, shape index: {}]
  %s5 = inlined_call_operand.vmem [shape: f32[1,32], index: 5, kind: input, shape index: {}]
  %s6 = inlined_call_operand.vmem [shape: f32[16,32], index: 6, kind: output, shape index: {}]
  %s7 = sld [smem:[#allocation0]]
  $region34: #{bert_encoder_forward.12} parent=0
    _
  %s9 = ssub.s32 1, %s7
  %s10 = scalar_select 0, %s9, %s7
  // Predicated region
  $region2: #{bert_encoder_forward.12} parent=0 // pred_check
    _
  $region3: #{bert_encoder_forward.12} parent=0 // pred_check_branch
    %12 = sbr.rel (0) target = $region5
  $region4: #{bert_encoder_forward.12} parent=0 // pred_region
    _
  $region5: #{bert_encoder_forward.12} parent=0 // pred_fallthru
    _
  // Predicated region
  $region6: #{bert_encoder_forward.12} parent=0 // pred_check
    _
  $region7: #{bert_encoder_forward.12} parent=0 // pred_check_branch
    %14 = sbr.rel (0) target = $region9
  $region8: #{bert_encoder_forward.12} parent=0 // pred_region
    _
  $region9: #{bert_encoder_forward.12} parent=0 // pred_fallthru
    _
  // Predicated region
  $region10: #{bert_encoder_forward.12} parent=0 // pred_check
    _
  $region11: #{bert_encoder_forward.12} parent=0 // pred_check_branch
    %16 = sbr.rel (0) target = $region13
  $region12: #{bert_encoder_forward.12} parent=0 // pred_region
    _
  $region13: #{bert_encoder_forward.12} parent=0 // pred_fallthru
    _
  // Predicated region
  $region14: #{bert_encoder_forward.12} parent=0 // pred_check
    _
  $region15: #{bert_encoder_forward.12} parent=0 // pred_check_branch
    %18 = sbr.rel (0) target = $region17
  $region16: #{bert_encoder_forward.12} parent=0 // pred_region
    _
  $region17: #{bert_encoder_forward.12} parent=0 // pred_fallthru
    _
  // Predicated region
  $region18: #{bert_encoder_forward.12} parent=0 // pred_check
    _
  $region19: #{bert_encoder_forward.12} parent=0 // pred_check_branch
    %20 = sbr.rel (0) target = $region21
  $region20: #{bert_encoder_forward.12} parent=0 // pred_region
    _
  $region21: #{bert_encoder_forward.12} parent=0 // pred_fallthru
    _
  // Predicated region
  $region22: #{bert_encoder_forward.12} parent=0 // pred_check
    _
  $region23: #{bert_encoder_forward.12} parent=0 // pred_check_branch
    %22 = sbr.rel (0) target = $region25
  $region24: #{bert_encoder_forward.12} parent=0 // pred_region
    _
  $region25: #{bert_encoder_forward.12} parent=0 // pred_fallthru
    _
  %v23 = vld [vmem:[%s0] sm:$0xff]
  %v24 = vld [vmem:[%s0 + $0x8] sm:$0xff]
  %v25 = vld [vmem:[%s1] sm:$0xff]
  %v26 = vld [vmem:[%s1 + $0x8] sm:$0xff]
  %v27 = vld [vmem:[%s1 + $0x10] sm:$0xff]
  %v28 = vld [vmem:[%s1 + $0x18] sm:$0xff]
  %v29 = vld [vmem:[%s2] sm:$0x1]
  %v31 = vperm.slane %v29, 0
  %vm33 = vcmask 261120
  %v35 = vsel %vm33, %v23, 0
  %v38 = vsel %vm33, %v24, 0
  %40 = vmatpush.msra.mxu0 0.0
  %41 = vmatpush.msra.mxu0 0.0
  %42 = vmatpush.msra.mxu0 0.0
  %43 = vmatpush.msra.mxu0 0.0
  %44 = vmatpush.msra.mxu0 0.0
  %45 = vmatpush.msra.mxu0 0.0
  %46 = vmatpush.msra.mxu0 0.0
  %47 = vmatpush.msra.mxu0 0.0
  %48 = vmatpush.msra.mxu0 0.0
  %49 = vmatpush.msra.mxu0 0.0
  %50 = vmatpush.msra.mxu0 0.0
  %51 = vmatpush.msra.mxu0 0.0
  %52 = vmatpush.msra.mxu0 %v28
  %53 = vmatpush.msra.mxu0 %v27
  %54 = vmatpush.msra.mxu0 %v26
  %55 = vmatpush.msra.mxu0 %v25
  %56 = vmatmul.f32.gmra.mxu0 %v35
  %v57 = vpop.f32.mrf.mxu0
  %v58 = vadd.f32 %v31, %v57
  %59 = vmatmul.f32.gmra.mxu0 %v38
  %v60 = vpop.f32.mrf.mxu0
  %v61 = vadd.f32 %v31, %v60
  %62 = vdwg.mxu0
  %v63 = vld [vmem:[%s3] sm:$0xff]
  %v64 = vld [vmem:[%s3 + $0x8] sm:$0xff]
  %v65 = vadd.f32 %v58, %v63
  %v66 = vadd.f32 %v61, %v64
  %v67 = vsel %vm33, %v65, 0.0
  %68 = vadd.xlane.f32.xlu0 %v67
  %v69 = vpop.xlane.xlu0 %68
  %v70 = vsel %vm33, %v66, 0.0
  %71 = vadd.xlane.f32.xlu0 %v70
  %v72 = vpop.xlane.xlu0 %71
  %v73 = vrcp.pop 32.0
  %v74 = vmul.f32 32.0, %v73
  %v75 = vsub.f32 1.0, %v74
  %v76 = vmul.f32 %v73, %v75
  %v77 = vadd.f32 %v73, %v76
  %vm78 = vweird.f32 %v73
  %v79 = vsel %vm78, %v73, %v77
  %v80 = vmul.f32 %v69, %v79
  %v81 = vmul.f32 %v72, %v79
  %v82 = vsub.f32 %v65, %v80
  %v83 = vsub.f32 %v66, %v81
  %v84 = vmul.f32 %v82, %v82
  %v85 = vmul.f32 %v83, %v83
  %v86 = vsel %vm33, %v84, 0.0
  %87 = vadd.xlane.f32.xlu0 %v86
  %v88 = vpop.xlane.xlu0 %87
  %v89 = vsel %vm33, %v85, 0.0
  %90 = vadd.xlane.f32.xlu0 %v89
  %v91 = vpop.xlane.xlu0 %90
  %v92 = vmul.f32 %v88, %v79
  %v93 = vmul.f32 %v91, %v79
  %v94 = vadd.f32 %v92, 1e-12
  %v95 = vadd.f32 %v93, 1e-12
  %v96 = vrsqrt.pop %v94
  %v97 = vmul.f32 %v96, %v94
  %v98 = vmul.f32 %v97, %v96
  %v99 = vmul.f32 0.5, %v98
  %v100 = vsub.f32 1.5, %v99
  %v101 = vmul.f32 %v96, %v100
  %vm102 = vweird.f32 %v94
  %vm103 = vweird.f32 %v96
  %vm104 = vmor %vm102, %vm103
  %v105 = vsel %vm104, %v96, %v101
  %v106 = vrsqrt.pop %v95
  %v107 = vmul.f32 %v106, %v95
  %v108 = vmul.f32 %v107, %v106
  %v109 = vmul.f32 0.5, %v108
  %v110 = vsub.f32 1.5, %v109
  %v111 = vmul.f32 %v106, %v110
  %vm112 = vweird.f32 %v95
  %vm113 = vweird.f32 %v106
  %vm114 = vmor %vm112, %vm113
  %v115 = vsel %vm114, %v106, %v111
  %v116 = vmul.f32 %v82, %v105
  %v117 = vmul.f32 %v83, %v115
  %v118 = vld [vmem:[%s4] sm:$0x1]
  %v120 = vperm.slane %v118, 0
  %v122 = vmul.f32 %v116, %v120
  %v123 = vmul.f32 %v117, %v120
  %v124 = vld [vmem:[%s5] sm:$0x1]
  %v126 = vperm.slane %v124, 0
  %v128 = vadd.f32 %v122, %v126
  %v129 = vadd.f32 %v123, %v126
  %130 = vst.msk [vmem:[%s6] sm:$0xff] %vm33, %v128
  %131 = vst.msk [vmem:[%s6 + $0x8] sm:$0xff] %vm33, %v129
  // Predicated region
  $region26: #{bert_encoder_forward.12} parent=0 // pred_check
    _
  $region27: #{bert_encoder_forward.12} parent=0 // pred_check_branch
    %133 = sbr.rel (0) target = $region29
  $region28: #{bert_encoder_forward.12} parent=0 // pred_region
    _
  $region29: #{bert_encoder_forward.12} parent=0 // pred_fallthru
    _
  // Predicated region
  $region30: #{bert_encoder_forward.12} parent=0 // pred_check
    _
  $region31: #{bert_encoder_forward.12} parent=0 // pred_check_branch
    %135 = sbr.rel (0) target = $region33
  $region32: #{bert_encoder_forward.12} parent=0 // pred_region
    _
  $region33: #{bert_encoder_forward.12} parent=0 // pred_fallthru
    _

// kernel: bert_encoder_forward.13
$region0: #{bert_encoder_forward.13}
  #allocation0 [shape = 'u32[]', space=smem, size = 0x4, offset = 0x4, fixed_abs, tag = 'smem constant byte address 0x4 - core index']
  #allocation1 [shape = 'u32[72,128]{1,0:T(1,128)}', space=vmem, size = 0x9000, scoped, tag = 'internal scratch']
  %s0 = inlined_call_operand.vmem [shape: f32[16,32], index: 0, kind: input, shape index: {}]
  %s1 = inlined_call_operand.vmem [shape: f32[32,128], index: 1, kind: input, shape index: {}]
  %s2 = inlined_call_operand.vmem [shape: f32[1,128], index: 2, kind: input, shape index: {}]
  %s3 = inlined_call_operand.vmem [shape: f32[16,128], index: 3, kind: output, shape index: {}]
  %s4 = sld [smem:[#allocation0]]
  $region22: #{bert_encoder_forward.13} parent=0
    _
  %s6 = ssub.s32 1, %s4
  %s7 = scalar_select 0, %s6, %s4
  // Predicated region
  $region2: #{bert_encoder_forward.13} parent=0 // pred_check
    _
  $region3: #{bert_encoder_forward.13} parent=0 // pred_check_branch
    %9 = sbr.rel (0) target = $region5
  $region4: #{bert_encoder_forward.13} parent=0 // pred_region
    _
  $region5: #{bert_encoder_forward.13} parent=0 // pred_fallthru
    _
  // Predicated region
  $region6: #{bert_encoder_forward.13} parent=0 // pred_check
    _
  $region7: #{bert_encoder_forward.13} parent=0 // pred_check_branch
    %11 = sbr.rel (0) target = $region9
  $region8: #{bert_encoder_forward.13} parent=0 // pred_region
    _
  $region9: #{bert_encoder_forward.13} parent=0 // pred_fallthru
    _
  // Predicated region
  $region10: #{bert_encoder_forward.13} parent=0 // pred_check
    _
  $region11: #{bert_encoder_forward.13} parent=0 // pred_check_branch
    %13 = sbr.rel (0) target = $region13
  $region12: #{bert_encoder_forward.13} parent=0 // pred_region
    _
  $region13: #{bert_encoder_forward.13} parent=0 // pred_fallthru
    _
  %v14 = vld [vmem:[%s0] sm:$0xff]
  %v15 = vld [vmem:[%s0 + $0x8] sm:$0xff]
  %v16 = vld [vmem:[%s1] sm:$0xff]
  %v17 = vld [vmem:[%s1 + $0x8] sm:$0xff]
  %v18 = vld [vmem:[%s1 + $0x10] sm:$0xff]
  %v19 = vld [vmem:[%s1 + $0x18] sm:$0xff]
  %v20 = vld [vmem:[%s2] sm:$0x1]
  %v22 = vperm.slane %v20, 0
  %vm24 = vcmask 261120
  %v26 = vsel %vm24, %v14, 0
  %v29 = vsel %vm24, %v15, 0
  %31 = vmatpush.msra.mxu0 0.0
  %32 = vmatpush.msra.mxu0 0.0
  %33 = vmatpush.msra.mxu0 0.0
  %34 = vmatpush.msra.mxu0 0.0
  %35 = vmatpush.msra.mxu0 0.0
  %36 = vmatpush.msra.mxu0 0.0
  %37 = vmatpush.msra.mxu0 0.0
  %38 = vmatpush.msra.mxu0 0.0
  %39 = vmatpush.msra.mxu0 0.0
  %40 = vmatpush.msra.mxu0 0.0
  %41 = vmatpush.msra.mxu0 0.0
  %42 = vmatpush.msra.mxu0 0.0
  %43 = vmatpush.msra.mxu0 %v19
  %44 = vmatpush.msra.mxu0 %v18
  %45 = vmatpush.msra.mxu0 %v17
  %46 = vmatpush.msra.mxu0 %v16
  %47 = vmatmul.f32.gmra.mxu0 %v26
  %v48 = vpop.f32.mrf.mxu0
  %v49 = vadd.f32 %v22, %v48
  %50 = vmatmul.f32.gmra.mxu0 %v29
  %v51 = vpop.f32.mrf.mxu0
  %v52 = vadd.f32 %v22, %v51
  %53 = vdwg.mxu0
  %v54 = vmul.f32 %v49, 0.5
  %v55 = vmul.f32 %v52, 0.5
  %v56 = vmul.f32 %v49, 0.70710677
  %v57 = vmul.f32 %v52, 0.70710677
  %v58 = vmul.f32 %v56, %v56
  %v59 = vmin.f32 16.0, %v58
  %v60 = vmul.f32 %v59, 2.1237322e-06
  %v61 = vadd.f32 %v60, 0.00028619796
  %v62 = vmul.f32 %v59, %v61
  %v63 = vadd.f32 %v62, 0.0036580483
  %v64 = vmul.f32 %v59, %v63
  %v65 = vadd.f32 %v64, 0.05243302
  %v66 = vmul.f32 %v59, %v65
  %v67 = vadd.f32 %v66, 0.18741608
  %v68 = vmul.f32 %v59, %v67
  %v69 = vadd.f32 %v68, 1.1283791
  %v70 = vmul.f32 %v56, %v69
  %v71 = vmul.f32 %v59, 3.8918573e-05
  %v72 = vadd.f32 %v71, 0.001143296
  %v73 = vmul.f32 %v59, %v72
  %v74 = vadd.f32 %v73, 0.014752088
  %v75 = vmul.f32 %v59, %v74
  %v76 = vadd.f32 %v75, 0.112945676
  %v77 = vmul.f32 %v59, %v76
  %v78 = vadd.f32 %v77, 0.4994258
  %v79 = vmul.f32 %v59, %v78
  %v80 = vadd.f32 %v79, 1.0
  %v81 = vrcp.pop %v80
  %v82 = vmul.f32 %v80, %v81
  %v83 = vsub.f32 1.0, %v82
  %v84 = vmul.f32 %v81, %v83
  %v85 = vadd.f32 %v81, %v84
  %vm86 = vweird.f32 %v80
  %vm87 = vweird.f32 %v81
  %vm88 = vmor %vm86, %vm87
  %v89 = vsel %vm88, %v81, %v85
  %v90 = vand.u32 2147483647, %v80
  %vm91 = vcmp.eq.f32.partialorder %v90, 8.507059e+37
  %v92 = vand.u32 %v80, 2147483648
  %v93 = vor.u32 1.1754944e-38, %v92
  %v94 = vsel %vm91, %v93, %v89
  %v95 = vmul.f32 %v70, %v94
  %v96 = vmin.f32 %v95, 1.0
  %v97 = vmax.f32 %v96, -1.0
  %v98 = vmul.f32 %v57, %v57
  %v99 = vmin.f32 16.0, %v98
  %v100 = vmul.f32 %v99, 2.1237322e-06
  %v101 = vadd.f32 %v100, 0.00028619796
  %v102 = vmul.f32 %v99, %v101
  %v103 = vadd.f32 %v102, 0.0036580483
  %v104 = vmul.f32 %v99, %v103
  %v105 = vadd.f32 %v104, 0.05243302
  %v106 = vmul.f32 %v99, %v105
  %v107 = vadd.f32 %v106, 0.18741608
  %v108 = vmul.f32 %v99, %v107
  %v109 = vadd.f32 %v108, 1.1283791
  %v110 = vmul.f32 %v57, %v109
  %v111 = vmul.f32 %v99, 3.8918573e-05
  %v112 = vadd.f32 %v111, 0.001143296
  %v113 = vmul.f32 %v99, %v112
  %v114 = vadd.f32 %v113, 0.014752088
  %v115 = vmul.f32 %v99, %v114
  %v116 = vadd.f32 %v115, 0.112945676
  %v117 = vmul.f32 %v99, %v116
  %v118 = vadd.f32 %v117, 0.4994258
  %v119 = vmul.f32 %v99, %v118
  %v120 = vadd.f32 %v119, 1.0
  %v121 = vrcp.pop %v120
  %v122 = vmul.f32 %v120, %v121
  %v123 = vsub.f32 1.0, %v122
  %v124 = vmul.f32 %v121, %v123
  %v125 = vadd.f32 %v121, %v124
  %vm126 = vweird.f32 %v120
  %vm127 = vweird.f32 %v121
  %vm128 = vmor %vm126, %vm127
  %v129 = vsel %vm128, %v121, %v125
  %v130 = vand.u32 2147483647, %v120
  %vm131 = vcmp.eq.f32.partialorder %v130, 8.507059e+37
  %v132 = vand.u32 %v120, 2147483648
  %v133 = vor.u32 1.1754944e-38, %v132
  %v134 = vsel %vm131, %v133, %v129
  %v135 = vmul.f32 %v110, %v134
  %v136 = vmin.f32 %v135, 1.0
  %v137 = vmax.f32 %v136, -1.0
  %v138 = vadd.f32 %v97, 1.0
  %v139 = vadd.f32 %v137, 1.0
  %v140 = vmul.f32 %v54, %v138
  %v141 = vmul.f32 %v55, %v139
  %142 = vst [vmem:[%s3] sm:$0xff] %v140
  %143 = vst [vmem:[%s3 + $0x8] sm:$0xff] %v141
  // Predicated region
  $region14: #{bert_encoder_forward.13} parent=0 // pred_check
    _
  $region15: #{bert_encoder_forward.13} parent=0 // pred_check_branch
    %145 = sbr.rel (0) target = $region17
  $region16: #{bert_encoder_forward.13} parent=0 // pred_region
    _
  $region17: #{bert_encoder_forward.13} parent=0 // pred_fallthru
    _
  // Predicated region
  $region18: #{bert_encoder_forward.13} parent=0 // pred_check
    _
  $region19: #{bert_encoder_forward.13} parent=0 // pred_check_branch
    %147 = sbr.rel (0) target = $region21
  $region20: #{bert_encoder_forward.13} parent=0 // pred_region
    _
  $region21: #{bert_encoder_forward.13} parent=0 // pred_fallthru
    _

// kernel: bert_encoder_forward.19
$region0: #{bert_encoder_forward.19}
  #allocation0 [shape = 'u32[]', space=smem, size = 0x4, offset = 0x4, fixed_abs, tag = 'smem constant byte address 0x4 - core index']
  #allocation1 [shape = 'u32[72,128]{1,0:T(1,128)}', space=vmem, size = 0x9000, scoped, tag = 'internal scratch']
  %s0 = inlined_call_operand.vmem [shape: f32[16,128], index: 0, kind: input, shape index: {}]
  %s1 = inlined_call_operand.vmem [shape: f32[128,32], index: 1, kind: input, shape index: {}]
  %s2 = inlined_call_operand.vmem [shape: f32[1,32], index: 2, kind: input, shape index: {}]
  %s3 = inlined_call_operand.vmem [shape: f32[16,32], index: 3, kind: input, shape index: {}]
  %s4 = inlined_call_operand.vmem [shape: f32[1,32], index: 4, kind: input, shape index: {}]
  %s5 = inlined_call_operand.vmem [shape: f32[1,32], index: 5, kind: input, shape index: {}]
  %s6 = inlined_call_operand.hbm [shape: f32[16,32], index: 6, kind: output, shape index: {}]
  %s7 = sld [smem:[#allocation0]]
  $region34: #{bert_encoder_forward.19} parent=0
    _
  %s9 = ssub.s32 1, %s7
  %s10 = scalar_select 0, %s9, %s7
  $region1: #{bert_encoder_forward.19} parent=0
    #allocation2 [shape = 'u8[8192]{0}', space=vmem, size = 0x2000, scoped, tag = 'output window, operand 0, single buffered']
    #allocation3 [shape = 's32[1]{0}', space=sflag, size = 0x4, scoped, tag = 'scoped memory for bert_encoder_forward.19']
    %11 = vsyncpa [#allocation3], 0
    // Predicated region
    $region2: #{bert_encoder_forward.19} parent=1 // pred_check
      _
    $region3: #{bert_encoder_forward.19} parent=1 // pred_check_branch
      %13 = sbr.rel (0) target = $region5
    $region4: #{bert_encoder_forward.19} parent=1 // pred_region
      _
    $region5: #{bert_encoder_forward.19} parent=1 // pred_fallthru
      _
    // Predicated region
    $region6: #{bert_encoder_forward.19} parent=1 // pred_check
      _
    $region7: #{bert_encoder_forward.19} parent=1 // pred_check_branch
      %15 = sbr.rel (0) target = $region9
    $region8: #{bert_encoder_forward.19} parent=1 // pred_region
      _
    $region9: #{bert_encoder_forward.19} parent=1 // pred_fallthru
      _
    // Predicated region
    $region10: #{bert_encoder_forward.19} parent=1 // pred_check
      _
    $region11: #{bert_encoder_forward.19} parent=1 // pred_check_branch
      %17 = sbr.rel (0) target = $region13
    $region12: #{bert_encoder_forward.19} parent=1 // pred_region
      _
    $region13: #{bert_encoder_forward.19} parent=1 // pred_fallthru
      _
    // Predicated region
    $region14: #{bert_encoder_forward.19} parent=1 // pred_check
      _
    $region15: #{bert_encoder_forward.19} parent=1 // pred_check_branch
      %19 = sbr.rel (0) target = $region17
    $region16: #{bert_encoder_forward.19} parent=1 // pred_region
      _
    $region17: #{bert_encoder_forward.19} parent=1 // pred_fallthru
      _
    // Predicated region
    $region18: #{bert_encoder_forward.19} parent=1 // pred_check
      _
    $region19: #{bert_encoder_forward.19} parent=1 // pred_check_branch
      %21 = sbr.rel (0) target = $region21
    $region20: #{bert_encoder_forward.19} parent=1 // pred_region
      _
    $region21: #{bert_encoder_forward.19} parent=1 // pred_fallthru
      _
    // Predicated region
    $region22: #{bert_encoder_forward.19} parent=1 // pred_check
      _
    $region23: #{bert_encoder_forward.19} parent=1 // pred_check_branch
      %23 = sbr.rel (0) target = $region25
    $region24: #{bert_encoder_forward.19} parent=1 // pred_region
      _
    $region25: #{bert_encoder_forward.19} parent=1 // pred_fallthru
      _
    %v24 = vld [vmem:[%s0] sm:$0xff]
    %v25 = vld [vmem:[%s0 + $0x8] sm:$0xff]
    %v26 = vld [vmem:[%s1] sm:$0xff]
    %v27 = vld [vmem:[%s1 + $0x8] sm:$0xff]
    %v28 = vld [vmem:[%s1 + $0x10] sm:$0xff]
    %v29 = vld [vmem:[%s1 + $0x18] sm:$0xff]
    %v30 = vld [vmem:[%s1 + $0x20] sm:$0xff]
    %v31 = vld [vmem:[%s1 + $0x28] sm:$0xff]
    %v32 = vld [vmem:[%s1 + $0x30] sm:$0xff]
    %v33 = vld [vmem:[%s1 + $0x38] sm:$0xff]
    %v34 = vld [vmem:[%s1 + $0x40] sm:$0xff]
    %v35 = vld [vmem:[%s1 + $0x48] sm:$0xff]
    %v36 = vld [vmem:[%s1 + $0x50] sm:$0xff]
    %v37 = vld [vmem:[%s1 + $0x58] sm:$0xff]
    %v38 = vld [vmem:[%s1 + $0x60] sm:$0xff]
    %v39 = vld [vmem:[%s1 + $0x68] sm:$0xff]
    %v40 = vld [vmem:[%s1 + $0x70] sm:$0xff]
    %v41 = vld [vmem:[%s1 + $0x78] sm:$0xff]
    %v42 = vld [vmem:[%s2] sm:$0x1]
    %v44 = vperm.slane %v42, 0
    %46 = vmatpush.msra.mxu0 %v41
    %47 = vmatpush.msra.mxu0 %v40
    %48 = vmatpush.msra.mxu0 %v39
    %49 = vmatpush.msra.mxu0 %v38
    %50 = vmatpush.msra.mxu0 %v37
    %51 = vmatpush.msra.mxu0 %v36
    %52 = vmatpush.msra.mxu0 %v35
    %53 = vmatpush.msra.mxu0 %v34
    %54 = vmatpush.msra.mxu0 %v33
    %55 = vmatpush.msra.mxu0 %v32
    %56 = vmatpush.msra.mxu0 %v31
    %57 = vmatpush.msra.mxu0 %v30
    %58 = vmatpush.msra.mxu0 %v29
    %59 = vmatpush.msra.mxu0 %v28
    %60 = vmatpush.msra.mxu0 %v27
    %61 = vmatpush.msra.mxu0 %v26
    %62 = vmatmul.f32.gmra.mxu0 %v24
    %v63 = vpop.f32.mrf.mxu0
    %v64 = vadd.f32 %v44, %v63
    %65 = vmatmul.f32.gmra.mxu0 %v25
    %v66 = vpop.f32.mrf.mxu0
    %v67 = vadd.f32 %v44, %v66
    %68 = vdwg.mxu0
    %v69 = vld [vmem:[%s3] sm:$0xff]
    %v70 = vld [vmem:[%s3 + $0x8] sm:$0xff]
    %v71 = vadd.f32 %v64, %v69
    %v72 = vadd.f32 %v67, %v70
    %vm73 = vcmask 261120
    %v74 = vsel %vm73, %v71, 0.0
    %75 = vadd.xlane.f32.xlu0 %v74
    %v76 = vpop.xlane.xlu0 %75
    %v77 = vsel %vm73, %v72, 0.0
    %78 = vadd.xlane.f32.xlu0 %v77
    %v79 = vpop.xlane.xlu0 %78
    %v80 = vrcp.pop 32.0
    %v81 = vmul.f32 32.0, %v80
    %v82 = vsub.f32 1.0, %v81
    %v83 = vmul.f32 %v80, %v82
    %v84 = vadd.f32 %v80, %v83
    %vm85 = vweird.f32 %v80
    %v86 = vsel %vm85, %v80, %v84
    %v87 = vmul.f32 %v76, %v86
    %v88 = vmul.f32 %v79, %v86
    %v89 = vsub.f32 %v71, %v87
    %v90 = vsub.f32 %v72, %v88
    %v91 = vmul.f32 %v89, %v89
    %v92 = vmul.f32 %v90, %v90
    %v93 = vsel %vm73, %v91, 0.0
    %94 = vadd.xlane.f32.xlu0 %v93
    %v95 = vpop.xlane.xlu0 %94
    %v96 = vsel %vm73, %v92, 0.0
    %97 = vadd.xlane.f32.xlu0 %v96
    %v98 = vpop.xlane.xlu0 %97
    %v99 = vmul.f32 %v95, %v86
    %v100 = vmul.f32 %v98, %v86
    %v101 = vadd.f32 %v99, 1e-12
    %v102 = vadd.f32 %v100, 1e-12
    %v103 = vrsqrt.pop %v101
    %v104 = vmul.f32 %v103, %v101
    %v105 = vmul.f32 %v104, %v103
    %v106 = vmul.f32 0.5, %v105
    %v107 = vsub.f32 1.5, %v106
    %v108 = vmul.f32 %v103, %v107
    %vm109 = vweird.f32 %v101
    %vm110 = vweird.f32 %v103
    %vm111 = vmor %vm109, %vm110
    %v112 = vsel %vm111, %v103, %v108
    %v113 = vrsqrt.pop %v102
    %v114 = vmul.f32 %v113, %v102
    %v115 = vmul.f32 %v114, %v113
    %v116 = vmul.f32 0.5, %v115
    %v117 = vsub.f32 1.5, %v116
    %v118 = vmul.f32 %v113, %v117
    %vm119 = vweird.f32 %v102
    %vm120 = vweird.f32 %v113
    %vm121 = vmor %vm119, %vm120
    %v122 = vsel %vm121, %v113, %v118
    %v123 = vmul.f32 %v89, %v112
    %v124 = vmul.f32 %v90, %v122
    %v125 = vld [vmem:[%s4] sm:$0x1]
    %v127 = vperm.slane %v125, 0
    %v129 = vmul.f32 %v123, %v127
    %v130 = vmul.f32 %v124, %v127
    %v131 = vld [vmem:[%s5] sm:$0x1]
    %v133 = vperm.slane %v131, 0
    %v135 = vadd.f32 %v129, %v133
    %v136 = vadd.f32 %v130, %v133
    %137 = vst.msk [vmem:[#allocation2] sm:$0xff] %vm73, %v135
    %138 = vst.msk [vmem:[#allocation2 + $0x8] sm:$0xff] %vm73, %v136
    // Predicated region
    $region26: #{bert_encoder_forward.19} parent=1 // pred_check
      _
    $region27: #{bert_encoder_forward.19} parent=1 // pred_check_branch
      %140 = sbr.rel (0) target = $region29
    $region28: #{bert_encoder_forward.19} parent=1 // pred_region
      %142 = vsyncadd [#allocation3], 0
      %s143 = sshll.u32 [#allocation2], 4
      %s144 = int_to_ptr.vmem [resolvable:$true] %s143
      %s145 = sshll.u32 %s6, 4
      %s146 = int_to_ptr.hbm [resolvable:$true] %s145
      %151 = dma.vmem_to_hbm [thread:$0]  %s144, 256, %s146, [#allocation3], 128, 128, 8
    $region29: #{bert_encoder_forward.19} parent=1 // pred_fallthru
      _
    // Predicated region
    $region30: #{bert_encoder_forward.19} parent=1 // pred_check
      _
    $region31: #{bert_encoder_forward.19} parent=1 // pred_check_branch
      %153 = sbr.rel (0) target = $region33
    $region32: #{bert_encoder_forward.19} parent=1 // pred_region
      %155 = dma.done [#allocation3], 256
    $region33: #{bert_encoder_forward.19} parent=1 // pred_fallthru
      _
    %156 = vsyncpa [#allocation3], 1

// kernel: bert_encoder_forward.15
$region0: #{bert_encoder_forward.15}
  #allocation0 [shape = 'u32[]', space=smem, size = 0x4, offset = 0x4, fixed_abs, tag = 'smem constant byte address 0x4 - core index']
  #allocation1 [shape = 'u32[72,128]{1,0:T(1,128)}', space=vmem, size = 0x9000, scoped, tag = 'internal scratch']
  %s0 = inlined_call_operand.vmem [shape: f32[16,32], index: 0, kind: input, shape index: {}]
  %s1 = inlined_call_operand.vmem [shape: f32[32,96], index: 1, kind: input, shape index: {}]
  %s2 = inlined_call_operand.vmem [shape: f32[1,96], index: 2, kind: input, shape index: {}]
  %s3 = inlined_call_operand.vmem [shape: f32[16,96], index: 3, kind: output, shape index: {}]
  %s4 = sld [smem:[#allocation0]]
  $region22: #{bert_encoder_forward.15} parent=0
    _
  %s6 = ssub.s32 1, %s4
  %s7 = scalar_select 0, %s6, %s4
  // Predicated region
  $region2: #{bert_encoder_forward.15} parent=0 // pred_check
    _
  $region3: #{bert_encoder_forward.15} parent=0 // pred_check_branch
    %9 = sbr.rel (0) target = $region5
  $region4: #{bert_encoder_forward.15} parent=0 // pred_region
    _
  $region5: #{bert_encoder_forward.15} parent=0 // pred_fallthru
    _
  // Predicated region
  $region6: #{bert_encoder_forward.15} parent=0 // pred_check
    _
  $region7: #{bert_encoder_forward.15} parent=0 // pred_check_branch
    %11 = sbr.rel (0) target = $region9
  $region8: #{bert_encoder_forward.15} parent=0 // pred_region
    _
  $region9: #{bert_encoder_forward.15} parent=0 // pred_fallthru
    _
  // Predicated region
  $region10: #{bert_encoder_forward.15} parent=0 // pred_check
    _
  $region11: #{bert_encoder_forward.15} parent=0 // pred_check_branch
    %13 = sbr.rel (0) target = $region13
  $region12: #{bert_encoder_forward.15} parent=0 // pred_region
    _
  $region13: #{bert_encoder_forward.15} parent=0 // pred_fallthru
    _
  %v14 = vld [vmem:[%s0] sm:$0xff]
  %v15 = vld [vmem:[%s0 + $0x8] sm:$0xff]
  %v16 = vld [vmem:[%s1] sm:$0xff]
  %v17 = vld [vmem:[%s1 + $0x8] sm:$0xff]
  %v18 = vld [vmem:[%s1 + $0x10] sm:$0xff]
  %v19 = vld [vmem:[%s1 + $0x18] sm:$0xff]
  %v20 = vld [vmem:[%s2] sm:$0x1]
  %v22 = vperm.slane %v20, 0
  %vm24 = vcmask 261120
  %v26 = vsel %vm24, %v14, 0
  %v29 = vsel %vm24, %v15, 0
  %31 = vmatpush.msra.mxu0 0.0
  %32 = vmatpush.msra.mxu0 0.0
  %33 = vmatpush.msra.mxu0 0.0
  %34 = vmatpush.msra.mxu0 0.0
  %35 = vmatpush.msra.mxu0 0.0
  %36 = vmatpush.msra.mxu0 0.0
  %37 = vmatpush.msra.mxu0 0.0
  %38 = vmatpush.msra.mxu0 0.0
  %39 = vmatpush.msra.mxu0 0.0
  %40 = vmatpush.msra.mxu0 0.0
  %41 = vmatpush.msra.mxu0 0.0
  %42 = vmatpush.msra.mxu0 0.0
  %43 = vmatpush.msra.mxu0 %v19
  %44 = vmatpush.msra.mxu0 %v18
  %45 = vmatpush.msra.mxu0 %v17
  %46 = vmatpush.msra.mxu0 %v16
  %47 = vmatmul.f32.gmra.mxu0 %v26
  %v48 = vpop.f32.mrf.mxu0
  %v49 = vadd.f32 %v22, %v48
  %50 = vmatmul.f32.gmra.mxu0 %v29
  %v51 = vpop.f32.mrf.mxu0
  %v52 = vadd.f32 %v22, %v51
  %53 = vdwg.mxu0
  %vm54 = vcmask 785408
  %55 = vst.msk [vmem:[%s3] sm:$0xff] %vm54, %v49
  %56 = vst.msk [vmem:[%s3 + $0x8] sm:$0xff] %vm54, %v52
  // Predicated region
  $region14: #{bert_encoder_forward.15} parent=0 // pred_check
    _
  $region15: #{bert_encoder_forward.15} parent=0 // pred_check_branch
    %58 = sbr.rel (0) target = $region17
  $region16: #{bert_encoder_forward.15} parent=0 // pred_region
    _
  $region17: #{bert_encoder_forward.15} parent=0 // pred_fallthru
    _
  // Predicated region
  $region18: #{bert_encoder_forward.15} parent=0 // pred_check
    _
  $region19: #{bert_encoder_forward.15} parent=0 // pred_check_branch
    %60 = sbr.rel (0) target = $region21
  $region20: #{bert_encoder_forward.15} parent=0 // pred_region
    _
  $region21: #{bert_encoder_forward.15} parent=0 // pred_fallthru
    _

// kernel: bert_encoder_forward.14
$region0: #{bert_encoder_forward.14}
  #allocation0 [shape = 'u32[]', space=smem, size = 0x4, offset = 0x4, fixed_abs, tag = 'smem constant byte address 0x4 - core index']
  #allocation1 [shape = 'u32[72,128]{1,0:T(1,128)}', space=vmem, size = 0x9000, scoped, tag = 'internal scratch']
  %s0 = inlined_call_operand.vmem [shape: f32[16,128], index: 0, kind: input, shape index: {}]
  %s1 = inlined_call_operand.vmem [shape: f32[128,32], index: 1, kind: input, shape index: {}]
  %s2 = inlined_call_operand.vmem [shape: f32[1,32], index: 2, kind: input, shape index: {}]
  %s3 = inlined_call_operand.vmem [shape: f32[16,32], index: 3, kind: input, shape index: {}]
  %s4 = inlined_call_operand.vmem [shape: f32[1,32], index: 4, kind: input, shape index: {}]
  %s5 = inlined_call_operand.vmem [shape: f32[1,32], index: 5, kind: input, shape index: {}]
  %s6 = inlined_call_operand.vmem [shape: f32[16,32], index: 6, kind: output, shape index: {}]
  %s7 = sld [smem:[#allocation0]]
  $region34: #{bert_encoder_forward.14} parent=0
    _
  %s9 = ssub.s32 1, %s7
  %s10 = scalar_select 0, %s9, %s7
  // Predicated region
  $region2: #{bert_encoder_forward.14} parent=0 // pred_check
    _
  $region3: #{bert_encoder_forward.14} parent=0 // pred_check_branch
    %12 = sbr.rel (0) target = $region5
  $region4: #{bert_encoder_forward.14} parent=0 // pred_region
    _
  $region5: #{bert_encoder_forward.14} parent=0 // pred_fallthru
    _
  // Predicated region
  $region6: #{bert_encoder_forward.14} parent=0 // pred_check
    _
  $region7: #{bert_encoder_forward.14} parent=0 // pred_check_branch
    %14 = sbr.rel (0) target = $region9
  $region8: #{bert_encoder_forward.14} parent=0 // pred_region
    _
  $region9: #{bert_encoder_forward.14} parent=0 // pred_fallthru
    _
  // Predicated region
  $region10: #{bert_encoder_forward.14} parent=0 // pred_check
    _
  $region11: #{bert_encoder_forward.14} parent=0 // pred_check_branch
    %16 = sbr.rel (0) target = $region13
  $region12: #{bert_encoder_forward.14} parent=0 // pred_region
    _
  $region13: #{bert_encoder_forward.14} parent=0 // pred_fallthru
    _
  // Predicated region
  $region14: #{bert_encoder_forward.14} parent=0 // pred_check
    _
  $region15: #{bert_encoder_forward.14} parent=0 // pred_check_branch
    %18 = sbr.rel (0) target = $region17
  $region16: #{bert_encoder_forward.14} parent=0 // pred_region
    _
  $region17: #{bert_encoder_forward.14} parent=0 // pred_fallthru
    _
  // Predicated region
  $region18: #{bert_encoder_forward.14} parent=0 // pred_check
    _
  $region19: #{bert_encoder_forward.14} parent=0 // pred_check_branch
    %20 = sbr.rel (0) target = $region21
  $region20: #{bert_encoder_forward.14} parent=0 // pred_region
    _
  $region21: #{bert_encoder_forward.14} parent=0 // pred_fallthru
    _
  // Predicated region
  $region22: #{bert_encoder_forward.14} parent=0 // pred_check
    _
  $region23: #{bert_encoder_forward.14} parent=0 // pred_check_branch
    %22 = sbr.rel (0) target = $region25
  $region24: #{bert_encoder_forward.14} parent=0 // pred_region
    _
  $region25: #{bert_encoder_forward.14} parent=0 // pred_fallthru
    _
  %v23 = vld [vmem:[%s0] sm:$0xff]
  %v24 = vld [vmem:[%s0 + $0x8] sm:$0xff]
  %v25 = vld [vmem:[%s1] sm:$0xff]
  %v26 = vld [vmem:[%s1 + $0x8] sm:$0xff]
  %v27 = vld [vmem:[%s1 + $0x10] sm:$0xff]
  %v28 = vld [vmem:[%s1 + $0x18] sm:$0xff]
  %v29 = vld [vmem:[%s1 + $0x20] sm:$0xff]
  %v30 = vld [vmem:[%s1 + $0x28] sm:$0xff]
  %v31 = vld [vmem:[%s1 + $0x30] sm:$0xff]
  %v32 = vld [vmem:[%s1 + $0x38] sm:$0xff]
  %v33 = vld [vmem:[%s1 + $0x40] sm:$0xff]
  %v34 = vld [vmem:[%s1 + $0x48] sm:$0xff]
  %v35 = vld [vmem:[%s1 + $0x50] sm:$0xff]
  %v36 = vld [vmem:[%s1 + $0x58] sm:$0xff]
  %v37 = vld [vmem:[%s1 + $0x60] sm:$0xff]
  %v38 = vld [vmem:[%s1 + $0x68] sm:$0xff]
  %v39 = vld [vmem:[%s1 + $0x70] sm:$0xff]
  %v40 = vld [vmem:[%s1 + $0x78] sm:$0xff]
  %v41 = vld [vmem:[%s2] sm:$0x1]
  %v43 = vperm.slane %v41, 0
  %45 = vmatpush.msra.mxu0 %v40
  %46 = vmatpush.msra.mxu0 %v39
  %47 = vmatpush.msra.mxu0 %v38
  %48 = vmatpush.msra.mxu0 %v37
  %49 = vmatpush.msra.mxu0 %v36
  %50 = vmatpush.msra.mxu0 %v35
  %51 = vmatpush.msra.mxu0 %v34
  %52 = vmatpush.msra.mxu0 %v33
  %53 = vmatpush.msra.mxu0 %v32
  %54 = vmatpush.msra.mxu0 %v31
  %55 = vmatpush.msra.mxu0 %v30
  %56 = vmatpush.msra.mxu0 %v29
  %57 = vmatpush.msra.mxu0 %v28
  %58 = vmatpush.msra.mxu0 %v27
  %59 = vmatpush.msra.mxu0 %v26
  %60 = vmatpush.msra.mxu0 %v25
  %61 = vmatmul.f32.gmra.mxu0 %v23
  %v62 = vpop.f32.mrf.mxu0
  %v63 = vadd.f32 %v43, %v62
  %64 = vmatmul.f32.gmra.mxu0 %v24
  %v65 = vpop.f32.mrf.mxu0
  %v66 = vadd.f32 %v43, %v65
  %67 = vdwg.mxu0
  %v68 = vld [vmem:[%s3] sm:$0xff]
  %v69 = vld [vmem:[%s3 + $0x8] sm:$0xff]
  %v70 = vadd.f32 %v63, %v68
  %v71 = vadd.f32 %v66, %v69
  %vm72 = vcmask 261120
  %v73 = vsel %vm72, %v70, 0.0
  %74 = vadd.xlane.f32.xlu0 %v73
  %v75 = vpop.xlane.xlu0 %74
  %v76 = vsel %vm72, %v71, 0.0
  %77 = vadd.xlane.f32.xlu0 %v76
  %v78 = vpop.xlane.xlu0 %77
  %v79 = vrcp.pop 32.0
  %v80 = vmul.f32 32.0, %v79
  %v81 = vsub.f32 1.0, %v80
  %v82 = vmul.f32 %v79, %v81
  %v83 = vadd.f32 %v79, %v82
  %vm84 = vweird.f32 %v79
  %v85 = vsel %vm84, %v79, %v83
  %v86 = vmul.f32 %v75, %v85
  %v87 = vmul.f32 %v78, %v85
  %v88 = vsub.f32 %v70, %v86
  %v89 = vsub.f32 %v71, %v87
  %v90 = vmul.f32 %v88, %v88
  %v91 = vmul.f32 %v89, %v89
  %v92 = vsel %vm72, %v90, 0.0
  %93 = vadd.xlane.f32.xlu0 %v92
  %v94 = vpop.xlane.xlu0 %93
  %v95 = vsel %vm72, %v91, 0.0
  %96 = vadd.xlane.f32.xlu0 %v95
  %v97 = vpop.xlane.xlu0 %96
  %v98 = vmul.f32 %v94, %v85
  %v99 = vmul.f32 %v97, %v85
  %v100 = vadd.f32 %v98, 1e-12
  %v101 = vadd.f32 %v99, 1e-12
  %v102 = vrsqrt.pop %v100
  %v103 = vmul.f32 %v102, %v100
  %v104 = vmul.f32 %v103, %v102
  %v105 = vmul.f32 0.5, %v104
  %v106 = vsub.f32 1.5, %v105
  %v107 = vmul.f32 %v102, %v106
  %vm108 = vweird.f32 %v100
  %vm109 = vweird.f32 %v102
  %vm110 = vmor %vm108, %vm109
  %v111 = vsel %vm110, %v102, %v107
  %v112 = vrsqrt.pop %v101
  %v113 = vmul.f32 %v112, %v101
  %v114 = vmul.f32 %v113, %v112
  %v115 = vmul.f32 0.5, %v114
  %v116 = vsub.f32 1.5, %v115
  %v117 = vmul.f32 %v112, %v116
  %vm118 = vweird.f32 %v101
  %vm119 = vweird.f32 %v112
  %vm120 = vmor %vm118, %vm119
  %v121 = vsel %vm120, %v112, %v117
  %v122 = vmul.f32 %v88, %v111
  %v123 = vmul.f32 %v89, %v121
  %v124 = vld [vmem:[%s4] sm:$0x1]
  %v126 = vperm.slane %v124, 0
  %v128 = vmul.f32 %v122, %v126
  %v129 = vmul.f32 %v123, %v126
  %v130 = vld [vmem:[%s5] sm:$0x1]
  %v132 = vperm.slane %v130, 0
  %v134 = vadd.f32 %v128, %v132
  %v135 = vadd.f32 %v129, %v132
  %136 = vst.msk [vmem:[%s6] sm:$0xff] %vm72, %v134
  %137 = vst.msk [vmem:[%s6 + $0x8] sm:$0xff] %vm72, %v135
  // Predicated region
  $region26: #{bert_encoder_forward.14} parent=0 // pred_check
    _
  $region27: #{bert_encoder_forward.14} parent=0 // pred_check_branch
    %139 = sbr.rel (0) target = $region29
  $region28: #{bert_encoder_forward.14} parent=0 // pred_region
    _
  $region29: #{bert_encoder_forward.14} parent=0 // pred_fallthru
    _
  // Predicated region
  $region30: #{bert_encoder_forward.14} parent=0 // pred_check
    _
  $region31: #{bert_encoder_forward.14} parent=0 // pred_check_branch
    %141 = sbr.rel (0) target = $region33
  $region32: #{bert_encoder_forward.14} parent=0 // pred_region
    _
  $region33: #{bert_encoder_forward.14} parent=0 // pred_fallthru
    _

</llo_original>
